<compile_context>
chip_gen: v7x
topology: tpu7x:2x2x1
jax: 0.10.0
libtpu: 0.0.40
codegen_flags: <defaults>
</compile_context>

<pallas_src>
import math
import functools

import jax
import jax.numpy as jnp
from jax.experimental import pallas as pl
from jax.experimental.pallas import tpu as pltpu


def _layernorm(h, g, b, eps=1e-5):
    # h: (M, C) f32; g/b: (1, C) f32
    mu = jnp.mean(h, axis=-1, keepdims=True)
    var = jnp.mean((h - mu) ** 2, axis=-1, keepdims=True)
    return (h - mu) * jax.lax.rsqrt(var + eps) * g + b


def block_kernel(n_head,
                 x_ref,
                 ln1_g, ln1_b,
                 w_qkv, b_qkv,
                 wo, bo,
                 ln2_g, ln2_b,
                 w1, b1, w2, b2,
                 out_ref):
    Bb, T, C = x_ref.shape
    D = C // n_head

    xf = x_ref[...].reshape(Bb * T, C)                     # (M, C) f32

    # ---- ln1 (f32) + fused QKV projection: one bf16 MXU matmul, N = 3C ----
    h = _layernorm(xf, ln1_g[...], ln1_b[...])
    qkv = jnp.dot(h.astype(jnp.bfloat16), w_qkv[...],
                  preferred_element_type=jnp.float32) + b_qkv[...]   # (M, 3C)
    # Static lane slices (1/sqrt(D) is already folded into the Q weights/bias).
    q = qkv[:, :C].astype(jnp.bfloat16)
    k = qkv[:, C:2 * C].astype(jnp.bfloat16)
    v = qkv[:, 2 * C:].astype(jnp.bfloat16)

    # Causal mask, shared across heads / batch elements of this block.
    row = jax.lax.broadcasted_iota(jnp.int32, (T, T), 0)
    col = jax.lax.broadcasted_iota(jnp.int32, (T, T), 1)
    causal = (row >= col)[None]                             # (1, T, T)

    # ---- attention: inherently per (batch, head); scores kept resident ----
    y_rows = []
    for b in range(Bb):
        qb = q[b * T:(b + 1) * T, :]
        kb = k[b * T:(b + 1) * T, :]
        vb = v[b * T:(b + 1) * T, :]
        # Head-major (n_head, T, D) views of the fused projection output.
        qh = jnp.stack([qb[:, hh * D:(hh + 1) * D] for hh in range(n_head)])
        kh = jnp.stack([kb[:, hh * D:(hh + 1) * D] for hh in range(n_head)])
        vh = jnp.stack([vb[:, hh * D:(hh + 1) * D] for hh in range(n_head)])

        att = jnp.einsum('hqd,hkd->hqk', qh, kh,
                         preferred_element_type=jnp.float32)         # (nh,T,T)
        att = jnp.where(causal, att, -1e30)       # finite fill: no NaN risk
        att = att - jnp.max(att, axis=-1, keepdims=True)
        p = jnp.exp(att)
        p = p * pl.reciprocal(jnp.sum(p, axis=-1, keepdims=True), approx=True)
        # attn_drop: identity (eval)

        yv = jnp.einsum('hqk,hkd->hqd', p.astype(jnp.bfloat16), vh,
                        preferred_element_type=jnp.float32)          # (nh,T,D)
        # Merge heads back into the lane dimension -> (T, C).
        y_rows.append(jnp.concatenate([yv[hh] for hh in range(n_head)],
                                      axis=-1))
    y = y_rows[0] if Bb == 1 else jnp.concatenate(y_rows, axis=0)    # (M, C)

    # ---- single full-width output projection: (M, C) @ (C, C) ----
    y = jnp.dot(y.astype(jnp.bfloat16), wo[...],
                preferred_element_type=jnp.float32) + bo[...]
    # resid_drop: identity (eval)
    x1 = xf + y

    # ---- ln2 (f32) + MLP (bf16 MXU, exact erf GELU in f32) ----
    h2 = _layernorm(x1, ln2_g[...], ln2_b[...])
    m = jnp.dot(h2.astype(jnp.bfloat16), w1[...],
                preferred_element_type=jnp.float32) + b1[...]
    m = 0.5 * m * (1.0 + jax.lax.erf(m * (1.0 / math.sqrt(2.0))))
    m = jnp.dot(m.astype(jnp.bfloat16), w2[...],
                preferred_element_type=jnp.float32) + b2[...]
    # dropout: identity (eval)

    out_ref[...] = (x1 + m).reshape(Bb, T, C).astype(out_ref.dtype)


def prepare_params(params, n_head):
    """One-time weight re-layout / bf16 cast (hoisted out of the forward path)."""
    C = params["wq"].shape[0]
    D = C // n_head
    scale = 1.0 / math.sqrt(D)
    wdt = jnp.bfloat16   # MXU-native operand dtype on v5e/v6e/v7x
    # Fused QKV weights, 1/sqrt(D) folded into the Q slice (weights AND bias).
    w_qkv = jnp.concatenate([params["wq"] * scale, params["wk"], params["wv"]],
                            axis=1).astype(wdt)                      # (C, 3C)
    b_qkv = jnp.concatenate([params["bq"] * scale, params["bk"], params["bv"]],
                            axis=1).astype(jnp.float32)              # (1, 3C)
    return {
        "ln1_g": params["ln1_g"].astype(jnp.float32),
        "ln1_b": params["ln1_b"].astype(jnp.float32),
        "w_qkv": w_qkv, "b_qkv": b_qkv,
        "wo": params["wo"].astype(wdt),
        "bo": params["bo"].astype(jnp.float32),
        "ln2_g": params["ln2_g"].astype(jnp.float32),
        "ln2_b": params["ln2_b"].astype(jnp.float32),
        "w1": params["w1"].astype(wdt), "b1": params["b1"].astype(jnp.float32),
        "w2": params["w2"].astype(wdt), "b2": params["b2"].astype(jnp.float32),
    }


def _vmem_limit_bytes(Bb, T, C, n_head):
    """Size scoped VMEM from actual buffer needs (with headroom), not a flat cap."""
    H = 4 * C
    m = Bb * T
    f32, bf16 = 4, 2
    io = 2 * 2 * (Bb * T * C * f32)                       # x/out blocks, 2-buffered
    weights = 2 * (C * 3 * C + C * C + C * H + H * C) * bf16   # 2-buffered weights
    biases = 2 * (3 * C + C + H + C + 4 * C) * f32
    interm = (m * 3 * C + 3 * m * C + 2 * Bb * n_head * T * T
              + m * H + 6 * m * C) * f32                  # live f32 intermediates
    total = io + weights + biases + interm
    return int(min(max(2 * total, 8 * 1024 * 1024), 64 * 1024 * 1024))


def block_forward(x, prep, n_head):
    """x: (B, T, C) float32.  prep: output of prepare_params (bf16 weights)."""
    B, T, C = x.shape
    H = 4 * C

    # Grid over batch blocks: for even B use exactly 2 parallel steps (keeps
    # both v7x TensorCores busy); otherwise collapse into one step so the whole
    # batch is flattened into the matmul M dimension.
    n_steps = 2 if (B % 2 == 0 and B >= 2) else 1
    Bb = B // n_steps

    def rep(shape):
        # Whole-array block, same tile for every grid step.
        # TODO(synk): at large C these constant-index weight blocks should be
        # single-buffered / tiled over H to stay within v7x's 64 MiB VMEM.
        return pl.BlockSpec(shape, lambda i: (0,) * len(shape))

    in_specs = [
        pl.BlockSpec((Bb, T, C), lambda i: (i, 0, 0)),   # x, tiled over batch blocks
        rep((1, C)), rep((1, C)),                        # ln1 gamma/beta
        rep((C, 3 * C)), rep((1, 3 * C)),                # fused QKV weight/bias
        rep((C, C)), rep((1, C)),                        # output projection
        rep((1, C)), rep((1, C)),                        # ln2 gamma/beta
        rep((C, H)), rep((1, H)),                        # mlp fc
        rep((H, C)), rep((1, C)),                        # mlp proj
    ]
    out_spec = pl.BlockSpec((Bb, T, C), lambda i: (i, 0, 0))

    # Advisory cost estimate for XLA's scheduler.
    Dh = C // n_head
    flops = (2 * B * T * C * (3 * C)                 # fused QKV
             + 2 * 2 * B * n_head * T * T * Dh       # QK^T + PV
             + 2 * B * T * C * C                     # output projection
             + 2 * 2 * B * T * C * H)                # MLP
    transcendentals = B * n_head * T * T + B * T * H
    bytes_accessed = (2 * B * T * C * 4
                      + (3 * C * C + C * C + C * H + H * C) * 2
                      + (3 * C + C + H + C + 4 * C) * 4)

    kernel = functools.partial(block_kernel, n_head)
    return pl.pallas_call(
        kernel,
        out_shape=jax.ShapeDtypeStruct((B, T, C), x.dtype),
        grid_spec=pltpu.PrefetchScalarGridSpec(
            num_scalar_prefetch=0,
            grid=(n_steps,),
            in_specs=in_specs,
            out_specs=out_spec,
        ),
        compiler_params=pltpu.CompilerParams(
            dimension_semantics=("parallel",),
            vmem_limit_bytes=_vmem_limit_bytes(Bb, T, C, n_head),
        ),
        cost_estimate=pl.CostEstimate(
            flops=flops,
            transcendentals=transcendentals,
            bytes_accessed=bytes_accessed),
    )(
        x,
        prep["ln1_g"], prep["ln1_b"],
        prep["w_qkv"], prep["b_qkv"],
        prep["wo"], prep["bo"],
        prep["ln2_g"], prep["ln2_b"],
        prep["w1"], prep["b1"],
        prep["w2"], prep["b2"],
    )


def init_params(key, C):
    # Master weights in f32, stored as (in, out) so the forward computes
    # x @ W + b (== PyTorch's x @ W.T + b with W of shape (out, in)).
    H = 4 * C
    ks = jax.random.split(key, 6)
    s = 0.02
    return {
        "ln1_g": jnp.ones((1, C), jnp.float32),
        "ln1_b": jnp.zeros((1, C), jnp.float32),
        "ln2_g": jnp.ones((1, C), jnp.float32),
        "ln2_b": jnp.zeros((1, C), jnp.float32),
        "wq": s * jax.random.normal(ks[0], (C, C), jnp.float32),
        "bq": jnp.zeros((1, C), jnp.float32),
        "wk": s * jax.random.normal(ks[1], (C, C), jnp.float32),
        "bk": jnp.zeros((1, C), jnp.float32),
        "wv": s * jax.random.normal(ks[2], (C, C), jnp.float32),
        "bv": jnp.zeros((1, C), jnp.float32),
        "wo": s * jax.random.normal(ks[3], (C, C), jnp.float32),
        "bo": jnp.zeros((1, C), jnp.float32),
        "w1": s * jax.random.normal(ks[4], (C, H), jnp.float32),
        "b1": jnp.zeros((1, H), jnp.float32),
        "w2": s * jax.random.normal(ks[5], (H, C), jnp.float32),
        "b2": jnp.zeros((1, C), jnp.float32),
    }


def block_reference(x, p, n_head):
    # pure-JAX f32 reference for sanity checking
    B, T, C = x.shape
    D = C // n_head

    def ln(h, g, b):
        mu = h.mean(-1, keepdims=True)
        var = ((h - mu) ** 2).mean(-1, keepdims=True)
        return (h - mu) / jnp.sqrt(var + 1e-5) * g + b

    h = ln(x, p["ln1_g"], p["ln1_b"])
    q = (h @ p["wq"] + p["bq"]).reshape(B, T, n_head, D).transpose(0, 2, 1, 3)
    k = (h @ p["wk"] + p["bk"]).reshape(B, T, n_head, D).transpose(0, 2, 1, 3)
    v = (h @ p["wv"] + p["bv"]).reshape(B, T, n_head, D).transpose(0, 2, 1, 3)
    att = jnp.einsum("bhtd,bhsd->bhts", q, k) / math.sqrt(D)
    mask = jnp.tril(jnp.ones((T, T), bool))
    att = jnp.where(mask, att, -jnp.inf)
    att = jax.nn.softmax(att, axis=-1)
    y = jnp.einsum("bhts,bhsd->bhtd", att, v).transpose(0, 2, 1, 3).reshape(B, T, C)
    y = y @ p["wo"] + p["bo"]
    x = x + y
    h2 = ln(x, p["ln2_g"], p["ln2_b"])
    m = h2 @ p["w1"] + p["b1"]
    m = 0.5 * m * (1.0 + jax.lax.erf(m / math.sqrt(2.0)))
    m = m @ p["w2"] + p["b2"]
    return x + m


if __name__ == "__main__":
    # Small but TPU-friendly shapes: C multiple of 128 (lane-dense stores),
    # T multiple of 8, even B (two parallel grid steps -> both v7x TCs busy).
    B, T, C, n_head = 2, 16, 128, 4
    key = jax.random.PRNGKey(0)
    kx, kp = jax.random.split(key)
    x = jax.random.normal(kx, (B, T, C), jnp.float32)
    params = init_params(kp, C)

    # One-time weight re-layout (hoisted out of the per-forward path).
    prep = prepare_params(params, n_head)

    out = jax.block_until_ready(block_forward(x, prep, n_head))
    ref = block_reference(x, params, n_head)

    assert out.shape == (B, T, C)
    max_err = float(jnp.max(jnp.abs(out - ref)))
    # bf16 MXU operands vs. the f32 reference -> looser tolerance than pure f32.
    assert max_err < 2e-2, f"mismatch vs JAX reference, max abs err {max_err}"
    print("KERNEL_OK")
</pallas_src>

<mosaic_0001>
module attributes {stable_mosaic.version = 11 : i64} {
  func.func @block_kernel(%arg0: i32, %arg1: memref<1x16x128xf32, #tpu.memory_space<vmem>>, %arg2: memref<1x128xf32, #tpu.memory_space<vmem>>, %arg3: memref<1x128xf32, #tpu.memory_space<vmem>>, %arg4: memref<128x384xbf16, #tpu.memory_space<vmem>>, %arg5: memref<1x384xf32, #tpu.memory_space<vmem>>, %arg6: memref<128x128xbf16, #tpu.memory_space<vmem>>, %arg7: memref<1x128xf32, #tpu.memory_space<vmem>>, %arg8: memref<1x128xf32, #tpu.memory_space<vmem>>, %arg9: memref<1x128xf32, #tpu.memory_space<vmem>>, %arg10: memref<128x512xbf16, #tpu.memory_space<vmem>>, %arg11: memref<1x512xf32, #tpu.memory_space<vmem>>, %arg12: memref<512x128xbf16, #tpu.memory_space<vmem>>, %arg13: memref<1x128xf32, #tpu.memory_space<vmem>>, %arg14: memref<1x16x128xf32, #tpu.memory_space<vmem>>) attributes {dimension_semantics = [#tpu.dimension_semantics<parallel>], iteration_bounds = array<i64: 2>, scalar_prefetch = 0 : i64, scratch_operands = 0 : i64, tpu.core_type = #tpu.core_type<tc>, window_params = [{transform_indices = @transform_0, window_bounds = array<i64: 1, 16, 128>}, {pipeline_mode = #tpu.pipeline_mode<synchronous>, transform_indices = @transform_1, window_bounds = array<i64: 1, 128>}, {pipeline_mode = #tpu.pipeline_mode<synchronous>, transform_indices = @transform_2, window_bounds = array<i64: 1, 128>}, {pipeline_mode = #tpu.pipeline_mode<synchronous>, transform_indices = @transform_3, window_bounds = array<i64: 128, 384>}, {pipeline_mode = #tpu.pipeline_mode<synchronous>, transform_indices = @transform_4, window_bounds = array<i64: 1, 384>}, {pipeline_mode = #tpu.pipeline_mode<synchronous>, transform_indices = @transform_5, window_bounds = array<i64: 128, 128>}, {pipeline_mode = #tpu.pipeline_mode<synchronous>, transform_indices = @transform_6, window_bounds = array<i64: 1, 128>}, {pipeline_mode = #tpu.pipeline_mode<synchronous>, transform_indices = @transform_7, window_bounds = array<i64: 1, 128>}, {pipeline_mode = #tpu.pipeline_mode<synchronous>, transform_indices = @transform_8, window_bounds = array<i64: 1, 128>}, {pipeline_mode = #tpu.pipeline_mode<synchronous>, transform_indices = @transform_9, window_bounds = array<i64: 128, 512>}, {pipeline_mode = #tpu.pipeline_mode<synchronous>, transform_indices = @transform_10, window_bounds = array<i64: 1, 512>}, {pipeline_mode = #tpu.pipeline_mode<synchronous>, transform_indices = @transform_11, window_bounds = array<i64: 512, 128>}, {pipeline_mode = #tpu.pipeline_mode<synchronous>, transform_indices = @transform_12, window_bounds = array<i64: 1, 128>}, {transform_indices = @transform_13, window_bounds = array<i64: 1, 16, 128>}]} {
    %c0 = arith.constant 0 : index
    %c0_0 = arith.constant 0 : index
    %c0_1 = arith.constant 0 : index
    %0 = vector.load %arg1[%c0, %c0_0, %c0_1] : memref<1x16x128xf32, #tpu.memory_space<vmem>>, vector<1x16x128xf32>
    %1 = vector.shape_cast %0 : vector<1x16x128xf32> to vector<16x128xf32>
    %c0_2 = arith.constant 0 : index
    %c0_3 = arith.constant 0 : index
    %2 = vector.load %arg2[%c0_2, %c0_3] : memref<1x128xf32, #tpu.memory_space<vmem>>, vector<1x128xf32>
    %c0_4 = arith.constant 0 : index
    %c0_5 = arith.constant 0 : index
    %3 = vector.load %arg3[%c0_4, %c0_5] : memref<1x128xf32, #tpu.memory_space<vmem>>, vector<1x128xf32>
    %cst = arith.constant dense<0.000000e+00> : vector<16xf32>
    %4 = vector.multi_reduction <add>, %1, %cst [1] : vector<16x128xf32> to vector<16xf32>
    %5 = vector.shape_cast %4 : vector<16xf32> to vector<16x1xf32>
    %cst_6 = arith.constant 1.280000e+02 : f32
    %6 = vector.broadcast %cst_6 : f32 to vector<16x1xf32>
    %7 = arith.divf %5, %6 : vector<16x1xf32>
    %8 = vector.broadcast %7 : vector<16x1xf32> to vector<16x128xf32>
    %9 = arith.subf %1, %8 : vector<16x128xf32>
    %10 = arith.mulf %9, %9 : vector<16x128xf32>
    %cst_7 = arith.constant dense<0.000000e+00> : vector<16xf32>
    %11 = vector.multi_reduction <add>, %10, %cst_7 [1] : vector<16x128xf32> to vector<16xf32>
    %12 = vector.shape_cast %11 : vector<16xf32> to vector<16x1xf32>
    %cst_8 = arith.constant 1.280000e+02 : f32
    %13 = vector.broadcast %cst_8 : f32 to vector<16x1xf32>
    %14 = arith.divf %12, %13 : vector<16x1xf32>
    %15 = vector.broadcast %7 : vector<16x1xf32> to vector<16x128xf32>
    %16 = arith.subf %1, %15 : vector<16x128xf32>
    %cst_9 = arith.constant 9.99999974E-6 : f32
    %17 = vector.broadcast %cst_9 : f32 to vector<16x1xf32>
    %18 = arith.addf %14, %17 : vector<16x1xf32>
    %19 = math.rsqrt %18 : vector<16x1xf32>
    %20 = vector.broadcast %19 : vector<16x1xf32> to vector<16x128xf32>
    %21 = arith.mulf %16, %20 : vector<16x128xf32>
    %22 = vector.broadcast %2 : vector<1x128xf32> to vector<16x128xf32>
    %23 = arith.mulf %21, %22 : vector<16x128xf32>
    %24 = vector.broadcast %3 : vector<1x128xf32> to vector<16x128xf32>
    %25 = arith.addf %23, %24 : vector<16x128xf32>
    %26 = arith.truncf %25 : vector<16x128xf32> to vector<16x128xbf16>
    %c0_10 = arith.constant 0 : index
    %c0_11 = arith.constant 0 : index
    %27 = vector.load %arg4[%c0_10, %c0_11] : memref<128x384xbf16, #tpu.memory_space<vmem>>, vector<128x384xbf16>
    %cst_12 = arith.constant dense<0.000000e+00> : vector<16x384xf32>
    %28 = tpu.matmul %26, %27, %cst_12 {dimension_numbers = #tpu.dot_dimension_numbers<[1], [0], [0], [1], [0, 0, 1, 1], [], []>} : vector<16x128xbf16>, vector<128x384xbf16>, vector<16x384xf32> -> vector<16x384xf32>
    %c0_13 = arith.constant 0 : index
    %c0_14 = arith.constant 0 : index
    %29 = vector.load %arg5[%c0_13, %c0_14] : memref<1x384xf32, #tpu.memory_space<vmem>>, vector<1x384xf32>
    %30 = vector.broadcast %29 : vector<1x384xf32> to vector<16x384xf32>
    %31 = arith.addf %28, %30 : vector<16x384xf32>
    %32 = vector.extract_strided_slice %31 {offsets = [0, 0], sizes = [16, 128], strides = [1, 1]} : vector<16x384xf32> to vector<16x128xf32>
    %33 = arith.truncf %32 : vector<16x128xf32> to vector<16x128xbf16>
    %34 = vector.extract_strided_slice %31 {offsets = [0, 128], sizes = [16, 128], strides = [1, 1]} : vector<16x384xf32> to vector<16x128xf32>
    %35 = arith.truncf %34 : vector<16x128xf32> to vector<16x128xbf16>
    %36 = vector.extract_strided_slice %31 {offsets = [0, 256], sizes = [16, 128], strides = [1, 1]} : vector<16x384xf32> to vector<16x128xf32>
    %37 = arith.truncf %36 : vector<16x128xf32> to vector<16x128xbf16>
    %38 = tpu.iota {dimensions = array<i32: 0>} : vector<16x16xi32>
    %39 = tpu.iota {dimensions = array<i32: 1>} : vector<16x16xi32>
    %40 = arith.cmpi sge, %38, %39 : vector<16x16xi32>
    %41 = vector.shape_cast %40 : vector<16x16xi1> to vector<1x16x16xi1>
    %42 = vector.extract_strided_slice %33 {offsets = [0, 0], sizes = [16, 32], strides = [1, 1]} : vector<16x128xbf16> to vector<16x32xbf16>
    %43 = vector.extract_strided_slice %33 {offsets = [0, 32], sizes = [16, 32], strides = [1, 1]} : vector<16x128xbf16> to vector<16x32xbf16>
    %44 = vector.extract_strided_slice %33 {offsets = [0, 64], sizes = [16, 32], strides = [1, 1]} : vector<16x128xbf16> to vector<16x32xbf16>
    %45 = vector.extract_strided_slice %33 {offsets = [0, 96], sizes = [16, 32], strides = [1, 1]} : vector<16x128xbf16> to vector<16x32xbf16>
    %46 = vector.shape_cast %42 : vector<16x32xbf16> to vector<1x16x32xbf16>
    %47 = vector.shape_cast %43 : vector<16x32xbf16> to vector<1x16x32xbf16>
    %48 = vector.shape_cast %44 : vector<16x32xbf16> to vector<1x16x32xbf16>
    %49 = vector.shape_cast %45 : vector<16x32xbf16> to vector<1x16x32xbf16>
    %50 = tpu.concatenate %46, %47, %48, %49 in 0 : vector<1x16x32xbf16>, vector<1x16x32xbf16>, vector<1x16x32xbf16>, vector<1x16x32xbf16> -> vector<4x16x32xbf16>
    %51 = vector.extract_strided_slice %35 {offsets = [0, 0], sizes = [16, 32], strides = [1, 1]} : vector<16x128xbf16> to vector<16x32xbf16>
    %52 = vector.extract_strided_slice %35 {offsets = [0, 32], sizes = [16, 32], strides = [1, 1]} : vector<16x128xbf16> to vector<16x32xbf16>
    %53 = vector.extract_strided_slice %35 {offsets = [0, 64], sizes = [16, 32], strides = [1, 1]} : vector<16x128xbf16> to vector<16x32xbf16>
    %54 = vector.extract_strided_slice %35 {offsets = [0, 96], sizes = [16, 32], strides = [1, 1]} : vector<16x128xbf16> to vector<16x32xbf16>
    %55 = vector.shape_cast %51 : vector<16x32xbf16> to vector<1x16x32xbf16>
    %56 = vector.shape_cast %52 : vector<16x32xbf16> to vector<1x16x32xbf16>
    %57 = vector.shape_cast %53 : vector<16x32xbf16> to vector<1x16x32xbf16>
    %58 = vector.shape_cast %54 : vector<16x32xbf16> to vector<1x16x32xbf16>
    %59 = tpu.concatenate %55, %56, %57, %58 in 0 : vector<1x16x32xbf16>, vector<1x16x32xbf16>, vector<1x16x32xbf16>, vector<1x16x32xbf16> -> vector<4x16x32xbf16>
    %60 = vector.extract_strided_slice %37 {offsets = [0, 0], sizes = [16, 32], strides = [1, 1]} : vector<16x128xbf16> to vector<16x32xbf16>
    %61 = vector.extract_strided_slice %37 {offsets = [0, 32], sizes = [16, 32], strides = [1, 1]} : vector<16x128xbf16> to vector<16x32xbf16>
    %62 = vector.extract_strided_slice %37 {offsets = [0, 64], sizes = [16, 32], strides = [1, 1]} : vector<16x128xbf16> to vector<16x32xbf16>
    %63 = vector.extract_strided_slice %37 {offsets = [0, 96], sizes = [16, 32], strides = [1, 1]} : vector<16x128xbf16> to vector<16x32xbf16>
    %64 = vector.shape_cast %60 : vector<16x32xbf16> to vector<1x16x32xbf16>
    %65 = vector.shape_cast %61 : vector<16x32xbf16> to vector<1x16x32xbf16>
    %66 = vector.shape_cast %62 : vector<16x32xbf16> to vector<1x16x32xbf16>
    %67 = vector.shape_cast %63 : vector<16x32xbf16> to vector<1x16x32xbf16>
    %68 = tpu.concatenate %64, %65, %66, %67 in 0 : vector<1x16x32xbf16>, vector<1x16x32xbf16>, vector<1x16x32xbf16>, vector<1x16x32xbf16> -> vector<4x16x32xbf16>
    "tpu.trace_start"() <{level = 10 : i32, message = "hqd,hkd->hqk"}> : () -> ()
    %cst_15 = arith.constant dense<0.000000e+00> : vector<4x16x16xf32>
    %69 = tpu.matmul %50, %59, %cst_15 {dimension_numbers = #tpu.dot_dimension_numbers<[2], [2], [1], [1], [0, 0, 0, 1, 1, 1], [0], [0]>} : vector<4x16x32xbf16>, vector<4x16x32xbf16>, vector<4x16x16xf32> -> vector<4x16x16xf32>
    %cst_16 = arith.constant -1.000000e+30 : f32
    "tpu.trace_stop"() : () -> ()
    %70 = vector.shape_cast %41 : vector<1x16x16xi1> to vector<1x16x16xi1>
    %71 = vector.broadcast %70 : vector<1x16x16xi1> to vector<4x16x16xi1>
    %72 = vector.broadcast %cst_16 : f32 to vector<4x16x16xf32>
    %73 = arith.select %71, %69, %72 : vector<4x16x16xi1>, vector<4x16x16xf32>
    %cst_17 = arith.constant dense<0xFF800000> : vector<4x16xf32>
    %74 = vector.multi_reduction <maximumf>, %73, %cst_17 [2] : vector<4x16x16xf32> to vector<4x16xf32>
    %75 = vector.shape_cast %74 : vector<4x16xf32> to vector<4x16x1xf32>
    %76 = vector.broadcast %75 : vector<4x16x1xf32> to vector<4x16x16xf32>
    %77 = arith.subf %73, %76 : vector<4x16x16xf32>
    %78 = math.exp %77 : vector<4x16x16xf32>
    %cst_18 = arith.constant dense<0.000000e+00> : vector<4x16xf32>
    %79 = vector.multi_reduction <add>, %78, %cst_18 [2] : vector<4x16x16xf32> to vector<4x16xf32>
    %80 = vector.shape_cast %79 : vector<4x16xf32> to vector<4x16x1xf32>
    %81 = tpu.reciprocal %80 {approx = true} : vector<4x16x1xf32> -> vector<4x16x1xf32>
    %82 = vector.broadcast %81 : vector<4x16x1xf32> to vector<4x16x16xf32>
    %83 = arith.mulf %78, %82 : vector<4x16x16xf32>
    %84 = arith.truncf %83 : vector<4x16x16xf32> to vector<4x16x16xbf16>
    "tpu.trace_start"() <{level = 10 : i32, message = "hqk,hkd->hqd"}> : () -> ()
    %cst_19 = arith.constant dense<0.000000e+00> : vector<4x16x32xf32>
    %85 = tpu.matmul %84, %68, %cst_19 {dimension_numbers = #tpu.dot_dimension_numbers<[2], [1], [1], [2], [0, 0, 0, 1, 1, 2], [0], [0]>} : vector<4x16x16xbf16>, vector<4x16x32xbf16>, vector<4x16x32xf32> -> vector<4x16x32xf32>
    "tpu.trace_stop"() : () -> ()
    %86 = vector.extract_strided_slice %85 {offsets = [0, 0, 0], sizes = [1, 16, 32], strides = [1, 1, 1]} : vector<4x16x32xf32> to vector<1x16x32xf32>
    %87 = vector.shape_cast %86 : vector<1x16x32xf32> to vector<16x32xf32>
    %88 = vector.extract_strided_slice %85 {offsets = [1, 0, 0], sizes = [1, 16, 32], strides = [1, 1, 1]} : vector<4x16x32xf32> to vector<1x16x32xf32>
    %89 = vector.shape_cast %88 : vector<1x16x32xf32> to vector<16x32xf32>
    %90 = vector.extract_strided_slice %85 {offsets = [2, 0, 0], sizes = [1, 16, 32], strides = [1, 1, 1]} : vector<4x16x32xf32> to vector<1x16x32xf32>
    %91 = vector.shape_cast %90 : vector<1x16x32xf32> to vector<16x32xf32>
    %92 = vector.extract_strided_slice %85 {offsets = [3, 0, 0], sizes = [1, 16, 32], strides = [1, 1, 1]} : vector<4x16x32xf32> to vector<1x16x32xf32>
    %93 = vector.shape_cast %92 : vector<1x16x32xf32> to vector<16x32xf32>
    %94 = tpu.concatenate %87, %89, %91, %93 in 1 : vector<16x32xf32>, vector<16x32xf32>, vector<16x32xf32>, vector<16x32xf32> -> vector<16x128xf32>
    %95 = arith.truncf %94 : vector<16x128xf32> to vector<16x128xbf16>
    %c0_20 = arith.constant 0 : index
    %c0_21 = arith.constant 0 : index
    %96 = vector.load %arg6[%c0_20, %c0_21] : memref<128x128xbf16, #tpu.memory_space<vmem>>, vector<128x128xbf16>
    %cst_22 = arith.constant dense<0.000000e+00> : vector<16x128xf32>
    %97 = tpu.matmul %95, %96, %cst_22 {dimension_numbers = #tpu.dot_dimension_numbers<[1], [0], [0], [1], [0, 0, 1, 1], [], []>} : vector<16x128xbf16>, vector<128x128xbf16>, vector<16x128xf32> -> vector<16x128xf32>
    %c0_23 = arith.constant 0 : index
    %c0_24 = arith.constant 0 : index
    %98 = vector.load %arg7[%c0_23, %c0_24] : memref<1x128xf32, #tpu.memory_space<vmem>>, vector<1x128xf32>
    %99 = vector.broadcast %98 : vector<1x128xf32> to vector<16x128xf32>
    %100 = arith.addf %97, %99 : vector<16x128xf32>
    %101 = arith.addf %1, %100 : vector<16x128xf32>
    %c0_25 = arith.constant 0 : index
    %c0_26 = arith.constant 0 : index
    %102 = vector.load %arg8[%c0_25, %c0_26] : memref<1x128xf32, #tpu.memory_space<vmem>>, vector<1x128xf32>
    %c0_27 = arith.constant 0 : index
    %c0_28 = arith.constant 0 : index
    %103 = vector.load %arg9[%c0_27, %c0_28] : memref<1x128xf32, #tpu.memory_space<vmem>>, vector<1x128xf32>
    %cst_29 = arith.constant dense<0.000000e+00> : vector<16xf32>
    %104 = vector.multi_reduction <add>, %101, %cst_29 [1] : vector<16x128xf32> to vector<16xf32>
    %105 = vector.shape_cast %104 : vector<16xf32> to vector<16x1xf32>
    %cst_30 = arith.constant 1.280000e+02 : f32
    %106 = vector.broadcast %cst_30 : f32 to vector<16x1xf32>
    %107 = arith.divf %105, %106 : vector<16x1xf32>
    %108 = vector.broadcast %107 : vector<16x1xf32> to vector<16x128xf32>
    %109 = arith.subf %101, %108 : vector<16x128xf32>
    %110 = arith.mulf %109, %109 : vector<16x128xf32>
    %cst_31 = arith.constant dense<0.000000e+00> : vector<16xf32>
    %111 = vector.multi_reduction <add>, %110, %cst_31 [1] : vector<16x128xf32> to vector<16xf32>
    %112 = vector.shape_cast %111 : vector<16xf32> to vector<16x1xf32>
    %cst_32 = arith.constant 1.280000e+02 : f32
    %113 = vector.broadcast %cst_32 : f32 to vector<16x1xf32>
    %114 = arith.divf %112, %113 : vector<16x1xf32>
    %115 = vector.broadcast %107 : vector<16x1xf32> to vector<16x128xf32>
    %116 = arith.subf %101, %115 : vector<16x128xf32>
    %cst_33 = arith.constant 9.99999974E-6 : f32
    %117 = vector.broadcast %cst_33 : f32 to vector<16x1xf32>
    %118 = arith.addf %114, %117 : vector<16x1xf32>
    %119 = math.rsqrt %118 : vector<16x1xf32>
    %120 = vector.broadcast %119 : vector<16x1xf32> to vector<16x128xf32>
    %121 = arith.mulf %116, %120 : vector<16x128xf32>
    %122 = vector.broadcast %102 : vector<1x128xf32> to vector<16x128xf32>
    %123 = arith.mulf %121, %122 : vector<16x128xf32>
    %124 = vector.broadcast %103 : vector<1x128xf32> to vector<16x128xf32>
    %125 = arith.addf %123, %124 : vector<16x128xf32>
    %126 = arith.truncf %125 : vector<16x128xf32> to vector<16x128xbf16>
    %c0_34 = arith.constant 0 : index
    %c0_35 = arith.constant 0 : index
    %127 = vector.load %arg10[%c0_34, %c0_35] : memref<128x512xbf16, #tpu.memory_space<vmem>>, vector<128x512xbf16>
    %cst_36 = arith.constant dense<0.000000e+00> : vector<16x512xf32>
    %128 = tpu.matmul %126, %127, %cst_36 {dimension_numbers = #tpu.dot_dimension_numbers<[1], [0], [0], [1], [0, 0, 1, 1], [], []>} : vector<16x128xbf16>, vector<128x512xbf16>, vector<16x512xf32> -> vector<16x512xf32>
    %c0_37 = arith.constant 0 : index
    %c0_38 = arith.constant 0 : index
    %129 = vector.load %arg11[%c0_37, %c0_38] : memref<1x512xf32, #tpu.memory_space<vmem>>, vector<1x512xf32>
    %130 = vector.broadcast %129 : vector<1x512xf32> to vector<16x512xf32>
    %131 = arith.addf %128, %130 : vector<16x512xf32>
    %cst_39 = arith.constant 5.000000e-01 : f32
    %132 = vector.broadcast %cst_39 : f32 to vector<16x512xf32>
    %133 = arith.mulf %132, %131 : vector<16x512xf32>
    %cst_40 = arith.constant 0.707106769 : f32
    %134 = vector.broadcast %cst_40 : f32 to vector<16x512xf32>
    %135 = arith.mulf %131, %134 : vector<16x512xf32>
    %136 = math.erf %135 : vector<16x512xf32>
    %cst_41 = arith.constant 1.000000e+00 : f32
    %137 = vector.broadcast %cst_41 : f32 to vector<16x512xf32>
    %138 = arith.addf %137, %136 : vector<16x512xf32>
    %139 = arith.mulf %133, %138 : vector<16x512xf32>
    %140 = arith.truncf %139 : vector<16x512xf32> to vector<16x512xbf16>
    %c0_42 = arith.constant 0 : index
    %c0_43 = arith.constant 0 : index
    %141 = vector.load %arg12[%c0_42, %c0_43] : memref<512x128xbf16, #tpu.memory_space<vmem>>, vector<512x128xbf16>
    %cst_44 = arith.constant dense<0.000000e+00> : vector<16x128xf32>
    %142 = tpu.matmul %140, %141, %cst_44 {dimension_numbers = #tpu.dot_dimension_numbers<[1], [0], [0], [1], [0, 0, 1, 1], [], []>} : vector<16x512xbf16>, vector<512x128xbf16>, vector<16x128xf32> -> vector<16x128xf32>
    %c0_45 = arith.constant 0 : index
    %c0_46 = arith.constant 0 : index
    %143 = vector.load %arg13[%c0_45, %c0_46] : memref<1x128xf32, #tpu.memory_space<vmem>>, vector<1x128xf32>
    %144 = vector.broadcast %143 : vector<1x128xf32> to vector<16x128xf32>
    %145 = arith.addf %142, %144 : vector<16x128xf32>
    %146 = arith.addf %101, %145 : vector<16x128xf32>
    %147 = vector.shape_cast %146 : vector<16x128xf32> to vector<1x16x128xf32>
    %c0_47 = arith.constant 0 : index
    %c0_48 = arith.constant 0 : index
    %c0_49 = arith.constant 0 : index
    %148 = vector.load %arg14[%c0_47, %c0_48, %c0_49] : memref<1x16x128xf32, #tpu.memory_space<vmem>>, vector<1x16x128xf32>
    tpu.vector_store %arg14[%c0_47, %c0_48, %c0_49], %147 {strides = array<i32>} : memref<1x16x128xf32, #tpu.memory_space<vmem>>, vector<1x16x128xf32>,
    return
  }
  func.func @transform_0(%arg0: i32) -> (i32, i32, i32) {
    %c0_i32 = arith.constant 0 : i32
    %c0_i32_0 = arith.constant 0 : i32
    %c0_i32_1 = arith.constant 0 : i32
    return %arg0, %c0_i32, %c0_i32_0 : i32, i32, i32
  }
  func.func @transform_1(%arg0: i32) -> (i32, i32) {
    %c0_i32 = arith.constant 0 : i32
    %c0_i32_0 = arith.constant 0 : i32
    %c0_i32_1 = arith.constant 0 : i32
    return %c0_i32, %c0_i32_0 : i32, i32
  }
  func.func @transform_2(%arg0: i32) -> (i32, i32) {
    %c0_i32 = arith.constant 0 : i32
    %c0_i32_0 = arith.constant 0 : i32
    %c0_i32_1 = arith.constant 0 : i32
    return %c0_i32, %c0_i32_0 : i32, i32
  }
  func.func @transform_3(%arg0: i32) -> (i32, i32) {
    %c0_i32 = arith.constant 0 : i32
    %c0_i32_0 = arith.constant 0 : i32
    %c0_i32_1 = arith.constant 0 : i32
    return %c0_i32, %c0_i32_0 : i32, i32
  }
  func.func @transform_4(%arg0: i32) -> (i32, i32) {
    %c0_i32 = arith.constant 0 : i32
    %c0_i32_0 = arith.constant 0 : i32
    %c0_i32_1 = arith.constant 0 : i32
    return %c0_i32, %c0_i32_0 : i32, i32
  }
  func.func @transform_5(%arg0: i32) -> (i32, i32) {
    %c0_i32 = arith.constant 0 : i32
    %c0_i32_0 = arith.constant 0 : i32
    %c0_i32_1 = arith.constant 0 : i32
    return %c0_i32, %c0_i32_0 : i32, i32
  }
  func.func @transform_6(%arg0: i32) -> (i32, i32) {
    %c0_i32 = arith.constant 0 : i32
    %c0_i32_0 = arith.constant 0 : i32
    %c0_i32_1 = arith.constant 0 : i32
    return %c0_i32, %c0_i32_0 : i32, i32
  }
  func.func @transform_7(%arg0: i32) -> (i32, i32) {
    %c0_i32 = arith.constant 0 : i32
    %c0_i32_0 = arith.constant 0 : i32
    %c0_i32_1 = arith.constant 0 : i32
    return %c0_i32, %c0_i32_0 : i32, i32
  }
  func.func @transform_8(%arg0: i32) -> (i32, i32) {
    %c0_i32 = arith.constant 0 : i32
    %c0_i32_0 = arith.constant 0 : i32
    %c0_i32_1 = arith.constant 0 : i32
    return %c0_i32, %c0_i32_0 : i32, i32
  }
  func.func @transform_9(%arg0: i32) -> (i32, i32) {
    %c0_i32 = arith.constant 0 : i32
    %c0_i32_0 = arith.constant 0 : i32
    %c0_i32_1 = arith.constant 0 : i32
    return %c0_i32, %c0_i32_0 : i32, i32
  }
  func.func @transform_10(%arg0: i32) -> (i32, i32) {
    %c0_i32 = arith.constant 0 : i32
    %c0_i32_0 = arith.constant 0 : i32
    %c0_i32_1 = arith.constant 0 : i32
    return %c0_i32, %c0_i32_0 : i32, i32
  }
  func.func @transform_11(%arg0: i32) -> (i32, i32) {
    %c0_i32 = arith.constant 0 : i32
    %c0_i32_0 = arith.constant 0 : i32
    %c0_i32_1 = arith.constant 0 : i32
    return %c0_i32, %c0_i32_0 : i32, i32
  }
  func.func @transform_12(%arg0: i32) -> (i32, i32) {
    %c0_i32 = arith.constant 0 : i32
    %c0_i32_0 = arith.constant 0 : i32
    %c0_i32_1 = arith.constant 0 : i32
    return %c0_i32, %c0_i32_0 : i32, i32
  }
  func.func @transform_13(%arg0: i32) -> (i32, i32, i32) {
    %c0_i32 = arith.constant 0 : i32
    %c0_i32_0 = arith.constant 0 : i32
    %c0_i32_1 = arith.constant 0 : i32
    return %arg0, %c0_i32, %c0_i32_0 : i32, i32, i32
  }
}

</mosaic_0001>

<llo_original>
// kernel: tpu_custom_call.1
$region0: #{tpu_custom_call.1}
  #allocation0 [shape = 'u32[]', space=smem, size = 0x4, offset = 0x4, fixed_abs, tag = 'smem constant byte address 0x4 - core index']
  #allocation1 [shape = 'u32[144,128]{1,0:T(1,128)}', space=vmem, size = 0x12000, scoped, tag = 'internal scratch']
  %s0 = inlined_call_operand.hbm [shape: f32[2,16,128], index: 0, kind: input, shape index: {}]
  %s1 = inlined_call_operand.hbm [shape: f32[1,128], index: 1, kind: input, shape index: {}]
  %s2 = inlined_call_operand.hbm [shape: f32[1,128], index: 2, kind: input, shape index: {}]
  %s3 = inlined_call_operand.hbm [shape: bf16[128,384], index: 3, kind: input, shape index: {}]
  %s4 = inlined_call_operand.vmem [shape: f32[1,384], index: 4, kind: input, shape index: {}]
  %s5 = inlined_call_operand.hbm [shape: bf16[128,128], index: 5, kind: input, shape index: {}]
  %s6 = inlined_call_operand.vmem [shape: f32[1,128], index: 6, kind: input, shape index: {}]
  %s7 = inlined_call_operand.vmem [shape: f32[1,128], index: 7, kind: input, shape index: {}]
  %s8 = inlined_call_operand.vmem [shape: f32[1,128], index: 8, kind: input, shape index: {}]
  %s9 = inlined_call_operand.hbm [shape: bf16[128,512], index: 9, kind: input, shape index: {}]
  %s10 = inlined_call_operand.vmem [shape: f32[1,512], index: 10, kind: input, shape index: {}]
  %s11 = inlined_call_operand.hbm [shape: bf16[512,128], index: 11, kind: input, shape index: {}]
  %s12 = inlined_call_operand.vmem [shape: f32[1,128], index: 12, kind: input, shape index: {}]
  %s13 = inlined_call_operand.hbm [shape: f32[2,16,128], index: 13, kind: output, shape index: {}]
  %s14 = sld [smem:[#allocation0]]
  $region113: #{tpu_custom_call.1} parent=0
    _
  %s16 = ssub.s32 1, %s14
  %s17 = scalar_select 0, %s16, %s14
  $region1: #{tpu_custom_call.1} parent=0
    #allocation2 [shape = 'u8[16384]{0}', space=vmem, size = 0x4000, scoped, tag = 'input window, operand 0']
    #allocation3 [shape = 's32[2]{0}', space=sflag, size = 0x8, scoped, tag = 'scoped memory for tpu_custom_call.1']
    #allocation4 [shape = 's32[2]{0}', space=sflag, size = 0x8, scoped, tag = 'scoped memory for tpu_custom_call.1']
    #allocation5 [shape = 'u8[512]{0}', space=vmem, size = 0x400, scoped, tag = 'input window, operand 1, single buffered']
    #allocation6 [shape = 's32[1]{0}', space=sflag, size = 0x4, scoped, tag = 'scoped memory for tpu_custom_call.1']
    #allocation7 [shape = 'u8[512]{0}', space=vmem, size = 0x400, scoped, tag = 'input window, operand 2, single buffered']
    #allocation8 [shape = 'u8[98304]{0}', space=vmem, size = 0x18000, scoped, tag = 'input window, operand 3, single buffered']
    #allocation9 [shape = 's32[1]{0}', space=sflag, size = 0x4, scoped, tag = 'scoped memory for tpu_custom_call.1']
    #allocation10 [shape = 'u8[32768]{0}', space=vmem, size = 0x8000, scoped, tag = 'input window, operand 5, single buffered']
    #allocation11 [shape = 'u8[131072]{0}', space=vmem, size = 0x20000, scoped, tag = 'input window, operand 9, single buffered']
    #allocation12 [shape = 's32[1]{0}', space=sflag, size = 0x4, scoped, tag = 'scoped memory for tpu_custom_call.1']
    #allocation13 [shape = 'u8[131072]{0}', space=vmem, size = 0x20000, scoped, tag = 'input window, operand 11, single buffered']
    #allocation14 [shape = 'u8[16384]{0}', space=vmem, size = 0x4000, scoped, tag = 'output window, operand 0']
    %18 = vsyncpa [#allocation3], 0
    %s19 = scalar_lea.sflag [#allocation3], 1
    %20 = vsyncpa %s19, 0
    %21 = vsyncpa [#allocation6], 0
    %22 = vsyncpa [#allocation9], 0
    %23 = vsyncpa [#allocation12], 0
    %24 = vsyncpa [#allocation4], 0
    %s25 = scalar_lea.sflag [#allocation4], 1
    %26 = vsyncpa %s25, 0
    loop: start=0, step=1, limit=4
    $region2: #{tpu_custom_call.1} parent=1 // loop_pre_header
      _
    $region3: #{tpu_custom_call.1} parent=1 // loop_header
      %s28 = sphi 0, %s32
      %p29 = scmp.ge.s32.totalorder %s28, 4
      %s38 = sphi 0, %s40
      %s41 = sphi 0, %s38
      %s42 = sphi 0, %s41
      %s58 = sphi 0, %s42
      %s62 = sphi 0, %s62
      %s64 = sphi 0, %s62
      %s65 = sphi 0, %s64
      %s79 = sphi 0, %s65
      %s83 = sphi 0, %s83
      %s85 = sphi 0, %s83
      %s86 = sphi 0, %s85
      %s100 = sphi 0, %s86
      %s104 = sphi 0, %s104
      %s106 = sphi 0, %s104
      %s107 = sphi 0, %s106
      %s121 = sphi 0, %s107
      %s125 = sphi 0, %s125
      %s127 = sphi 0, %s125
      %s128 = sphi 0, %s127
      %s142 = sphi 0, %s128
      %s146 = sphi 0, %s146
      %s148 = sphi 0, %s146
      %s149 = sphi 0, %s148
      %s163 = sphi 0, %s149
      %s167 = sphi 0, %s167
      %s169 = sphi 0, %s167
      %s170 = sphi 0, %s169
      %s184 = sphi 0, %s170
      %s188 = sphi 0, %s188
      %s190 = sphi 0, %s188
      %s191 = sphi 0, %s190
      %s205 = sphi 0, %s191
      %s209 = sphi 0, %s209
      %s211 = sphi 0, %s209
      %s212 = sphi 0, %s211
      %s226 = sphi 0, %s212
      %s230 = sphi 0, %s230
      %s232 = sphi 0, %s230
      %s233 = sphi 0, %s232
      %s247 = sphi 0, %s233
      %s251 = sphi 0, %s251
      %s253 = sphi 0, %s251
      %s254 = sphi 0, %s253
      %s268 = sphi 0, %s254
      %s272 = sphi 0, %s272
      %s274 = sphi 0, %s272
      %s275 = sphi 0, %s274
      %s289 = sphi 0, %s275
      %s293 = sphi 0, %s293
      %s295 = sphi 0, %s293
      %s296 = sphi 0, %s295
      %s310 = sphi 0, %s296
      %s316 = sphi 0, %s318
      %s319 = sphi 0, %s316
      %s320 = sphi 0, %s319
      %s336 = sphi 0, %s320
    $region4: #{tpu_custom_call.1} parent=1 // loop_header_branch
      %31 = sbr.rel (%p29) target = $region8
    $region5: #{tpu_custom_call.1} parent=1 // loop_body
      %s33 = ssub.s32 %s28, 1
      %s34 = ssub.s32 %s28, 2
      %s35 = sadd.s32 %s28, 1
      %s36 = ssub.s32 %s28, %s35
      %p37 = scmp.eq.s32.totalorder %s36, 0
      %s39 = sadd.s32 %s38, 1
      %s40 = scalar_select %p37, %s38, %s39
      %p43 = pneg %p37
      %p44 = scmp.eq.s32.totalorder %s28, 1
      %p45 = por %p43, %p44
      %p46 = scmp.ne.s32.totalorder %s38, %s41
      %p47 = scmp.eq.s32.totalorder %s28, 0
      %p48 = por %p46, %p47
      %p49 = scmp.ne.s32.totalorder %s38, %s41
      %p50 = scmp.eq.s32.totalorder %s33, 1
      %p51 = por %p49, %p50
      %p52 = scmp.ne.s32.totalorder %s41, %s42
      %p53 = scmp.eq.s32.totalorder %s33, 0
      %p54 = por %p52, %p53
      %p55 = scmp.ne.s32.totalorder %s41, %s42
      %p56 = scmp.eq.s32.totalorder %s34, 1
      %p57 = por %p55, %p56
      %p59 = scmp.ne.s32.totalorder %s42, %s58
      %p60 = scmp.eq.s32.totalorder %s34, 0
      %p61 = por %p59, %p60
      %s63 = sadd.s32 %s62, 1
      %p66 = scmp.eq.s32.totalorder %s28, 1
      %p67 = scmp.ne.s32.totalorder %s62, %s64
      %p68 = scmp.eq.s32.totalorder %s28, 0
      %p69 = por %p67, %p68
      %p70 = scmp.ne.s32.totalorder %s62, %s64
      %p71 = scmp.eq.s32.totalorder %s33, 1
      %p72 = por %p70, %p71
      %p73 = scmp.ne.s32.totalorder %s64, %s65
      %p74 = scmp.eq.s32.totalorder %s33, 0
      %p75 = por %p73, %p74
      %p76 = scmp.ne.s32.totalorder %s64, %s65
      %p77 = scmp.eq.s32.totalorder %s34, 1
      %p78 = por %p76, %p77
      %p80 = scmp.ne.s32.totalorder %s65, %s79
      %p81 = scmp.eq.s32.totalorder %s34, 0
      %p82 = por %p80, %p81
      %s84 = sadd.s32 %s83, 1
      %p87 = scmp.eq.s32.totalorder %s28, 1
      %p88 = scmp.ne.s32.totalorder %s83, %s85
      %p89 = scmp.eq.s32.totalorder %s28, 0
      %p90 = por %p88, %p89
      %p91 = scmp.ne.s32.totalorder %s83, %s85
      %p92 = scmp.eq.s32.totalorder %s33, 1
      %p93 = por %p91, %p92
      %p94 = scmp.ne.s32.totalorder %s85, %s86
      %p95 = scmp.eq.s32.totalorder %s33, 0
      %p96 = por %p94, %p95
      %p97 = scmp.ne.s32.totalorder %s85, %s86
      %p98 = scmp.eq.s32.totalorder %s34, 1
      %p99 = por %p97, %p98
      %p101 = scmp.ne.s32.totalorder %s86, %s100
      %p102 = scmp.eq.s32.totalorder %s34, 0
      %p103 = por %p101, %p102
      %s105 = sadd.s32 %s104, 1
      %p108 = scmp.eq.s32.totalorder %s28, 1
      %p109 = scmp.ne.s32.totalorder %s104, %s106
      %p110 = scmp.eq.s32.totalorder %s28, 0
      %p111 = por %p109, %p110
      %p112 = scmp.ne.s32.totalorder %s104, %s106
      %p113 = scmp.eq.s32.totalorder %s33, 1
      %p114 = por %p112, %p113
      %p115 = scmp.ne.s32.totalorder %s106, %s107
      %p116 = scmp.eq.s32.totalorder %s33, 0
      %p117 = por %p115, %p116
      %p118 = scmp.ne.s32.totalorder %s106, %s107
      %p119 = scmp.eq.s32.totalorder %s34, 1
      %p120 = por %p118, %p119
      %p122 = scmp.ne.s32.totalorder %s107, %s121
      %p123 = scmp.eq.s32.totalorder %s34, 0
      %p124 = por %p122, %p123
      %s126 = sadd.s32 %s125, 1
      %p129 = scmp.eq.s32.totalorder %s28, 1
      %p130 = scmp.ne.s32.totalorder %s125, %s127
      %p131 = scmp.eq.s32.totalorder %s28, 0
      %p132 = por %p130, %p131
      %p133 = scmp.ne.s32.totalorder %s125, %s127
      %p134 = scmp.eq.s32.totalorder %s33, 1
      %p135 = por %p133, %p134
      %p136 = scmp.ne.s32.totalorder %s127, %s128
      %p137 = scmp.eq.s32.totalorder %s33, 0
      %p138 = por %p136, %p137
      %p139 = scmp.ne.s32.totalorder %s127, %s128
      %p140 = scmp.eq.s32.totalorder %s34, 1
      %p141 = por %p139, %p140
      %p143 = scmp.ne.s32.totalorder %s128, %s142
      %p144 = scmp.eq.s32.totalorder %s34, 0
      %p145 = por %p143, %p144
      %s147 = sadd.s32 %s146, 1
      %p150 = scmp.eq.s32.totalorder %s28, 1
      %p151 = scmp.ne.s32.totalorder %s146, %s148
      %p152 = scmp.eq.s32.totalorder %s28, 0
      %p153 = por %p151, %p152
      %p154 = scmp.ne.s32.totalorder %s146, %s148
      %p155 = scmp.eq.s32.totalorder %s33, 1
      %p156 = por %p154, %p155
      %p157 = scmp.ne.s32.totalorder %s148, %s149
      %p158 = scmp.eq.s32.totalorder %s33, 0
      %p159 = por %p157, %p158
      %p160 = scmp.ne.s32.totalorder %s148, %s149
      %p161 = scmp.eq.s32.totalorder %s34, 1
      %p162 = por %p160, %p161
      %p164 = scmp.ne.s32.totalorder %s149, %s163
      %p165 = scmp.eq.s32.totalorder %s34, 0
      %p166 = por %p164, %p165
      %s168 = sadd.s32 %s167, 1
      %p171 = scmp.eq.s32.totalorder %s28, 1
      %p172 = scmp.ne.s32.totalorder %s167, %s169
      %p173 = scmp.eq.s32.totalorder %s28, 0
      %p174 = por %p172, %p173
      %p175 = scmp.ne.s32.totalorder %s167, %s169
      %p176 = scmp.eq.s32.totalorder %s33, 1
      %p177 = por %p175, %p176
      %p178 = scmp.ne.s32.totalorder %s169, %s170
      %p179 = scmp.eq.s32.totalorder %s33, 0
      %p180 = por %p178, %p179
      %p181 = scmp.ne.s32.totalorder %s169, %s170
      %p182 = scmp.eq.s32.totalorder %s34, 1
      %p183 = por %p181, %p182
      %p185 = scmp.ne.s32.totalorder %s170, %s184
      %p186 = scmp.eq.s32.totalorder %s34, 0
      %p187 = por %p185, %p186
      %s189 = sadd.s32 %s188, 1
      %p192 = scmp.eq.s32.totalorder %s28, 1
      %p193 = scmp.ne.s32.totalorder %s188, %s190
      %p194 = scmp.eq.s32.totalorder %s28, 0
      %p195 = por %p193, %p194
      %p196 = scmp.ne.s32.totalorder %s188, %s190
      %p197 = scmp.eq.s32.totalorder %s33, 1
      %p198 = por %p196, %p197
      %p199 = scmp.ne.s32.totalorder %s190, %s191
      %p200 = scmp.eq.s32.totalorder %s33, 0
      %p201 = por %p199, %p200
      %p202 = scmp.ne.s32.totalorder %s190, %s191
      %p203 = scmp.eq.s32.totalorder %s34, 1
      %p204 = por %p202, %p203
      %p206 = scmp.ne.s32.totalorder %s191, %s205
      %p207 = scmp.eq.s32.totalorder %s34, 0
      %p208 = por %p206, %p207
      %s210 = sadd.s32 %s209, 1
      %p213 = scmp.eq.s32.totalorder %s28, 1
      %p214 = scmp.ne.s32.totalorder %s209, %s211
      %p215 = scmp.eq.s32.totalorder %s28, 0
      %p216 = por %p214, %p215
      %p217 = scmp.ne.s32.totalorder %s209, %s211
      %p218 = scmp.eq.s32.totalorder %s33, 1
      %p219 = por %p217, %p218
      %p220 = scmp.ne.s32.totalorder %s211, %s212
      %p221 = scmp.eq.s32.totalorder %s33, 0
      %p222 = por %p220, %p221
      %p223 = scmp.ne.s32.totalorder %s211, %s212
      %p224 = scmp.eq.s32.totalorder %s34, 1
      %p225 = por %p223, %p224
      %p227 = scmp.ne.s32.totalorder %s212, %s226
      %p228 = scmp.eq.s32.totalorder %s34, 0
      %p229 = por %p227, %p228
      %s231 = sadd.s32 %s230, 1
      %p234 = scmp.eq.s32.totalorder %s28, 1
      %p235 = scmp.ne.s32.totalorder %s230, %s232
      %p236 = scmp.eq.s32.totalorder %s28, 0
      %p237 = por %p235, %p236
      %p238 = scmp.ne.s32.totalorder %s230, %s232
      %p239 = scmp.eq.s32.totalorder %s33, 1
      %p240 = por %p238, %p239
      %p241 = scmp.ne.s32.totalorder %s232, %s233
      %p242 = scmp.eq.s32.totalorder %s33, 0
      %p243 = por %p241, %p242
      %p244 = scmp.ne.s32.totalorder %s232, %s233
      %p245 = scmp.eq.s32.totalorder %s34, 1
      %p246 = por %p244, %p245
      %p248 = scmp.ne.s32.totalorder %s233, %s247
      %p249 = scmp.eq.s32.totalorder %s34, 0
      %p250 = por %p248, %p249
      %s252 = sadd.s32 %s251, 1
      %p255 = scmp.eq.s32.totalorder %s28, 1
      %p256 = scmp.ne.s32.totalorder %s251, %s253
      %p257 = scmp.eq.s32.totalorder %s28, 0
      %p258 = por %p256, %p257
      %p259 = scmp.ne.s32.totalorder %s251, %s253
      %p260 = scmp.eq.s32.totalorder %s33, 1
      %p261 = por %p259, %p260
      %p262 = scmp.ne.s32.totalorder %s253, %s254
      %p263 = scmp.eq.s32.totalorder %s33, 0
      %p264 = por %p262, %p263
      %p265 = scmp.ne.s32.totalorder %s253, %s254
      %p266 = scmp.eq.s32.totalorder %s34, 1
      %p267 = por %p265, %p266
      %p269 = scmp.ne.s32.totalorder %s254, %s268
      %p270 = scmp.eq.s32.totalorder %s34, 0
      %p271 = por %p269, %p270
      %s273 = sadd.s32 %s272, 1
      %p276 = scmp.eq.s32.totalorder %s28, 1
      %p277 = scmp.ne.s32.totalorder %s272, %s274
      %p278 = scmp.eq.s32.totalorder %s28, 0
      %p279 = por %p277, %p278
      %p280 = scmp.ne.s32.totalorder %s272, %s274
      %p281 = scmp.eq.s32.totalorder %s33, 1
      %p282 = por %p280, %p281
      %p283 = scmp.ne.s32.totalorder %s274, %s275
      %p284 = scmp.eq.s32.totalorder %s33, 0
      %p285 = por %p283, %p284
      %p286 = scmp.ne.s32.totalorder %s274, %s275
      %p287 = scmp.eq.s32.totalorder %s34, 1
      %p288 = por %p286, %p287
      %p290 = scmp.ne.s32.totalorder %s275, %s289
      %p291 = scmp.eq.s32.totalorder %s34, 0
      %p292 = por %p290, %p291
      %s294 = sadd.s32 %s293, 1
      %p297 = scmp.eq.s32.totalorder %s28, 1
      %p298 = scmp.ne.s32.totalorder %s293, %s295
      %p299 = scmp.eq.s32.totalorder %s28, 0
      %p300 = por %p298, %p299
      %p301 = scmp.ne.s32.totalorder %s293, %s295
      %p302 = scmp.eq.s32.totalorder %s33, 1
      %p303 = por %p301, %p302
      %p304 = scmp.ne.s32.totalorder %s295, %s296
      %p305 = scmp.eq.s32.totalorder %s33, 0
      %p306 = por %p304, %p305
      %p307 = scmp.ne.s32.totalorder %s295, %s296
      %p308 = scmp.eq.s32.totalorder %s34, 1
      %p309 = por %p307, %p308
      %p311 = scmp.ne.s32.totalorder %s296, %s310
      %p312 = scmp.eq.s32.totalorder %s34, 0
      %p313 = por %p311, %p312
      %s314 = ssub.s32 %s28, %s35
      %p315 = scmp.eq.s32.totalorder %s314, 0
      %s317 = sadd.s32 %s316, 1
      %s318 = scalar_select %p315, %s316, %s317
      %p321 = pneg %p315
      %p322 = scmp.eq.s32.totalorder %s28, 1
      %p323 = por %p321, %p322
      %p324 = scmp.ne.s32.totalorder %s316, %s319
      %p325 = scmp.eq.s32.totalorder %s28, 0
      %p326 = por %p324, %p325
      %p327 = scmp.ne.s32.totalorder %s316, %s319
      %p328 = scmp.eq.s32.totalorder %s33, 1
      %p329 = por %p327, %p328
      %p330 = scmp.ne.s32.totalorder %s319, %s320
      %p331 = scmp.eq.s32.totalorder %s33, 0
      %p332 = por %p330, %p331
      %p333 = scmp.ne.s32.totalorder %s319, %s320
      %p334 = scmp.eq.s32.totalorder %s34, 1
      %p335 = por %p333, %p334
      %p337 = scmp.ne.s32.totalorder %s320, %s336
      %p338 = scmp.eq.s32.totalorder %s34, 0
      %p339 = por %p337, %p338
      %p340 = scmp.le.s32.totalorder 1, %s28
      %p341 = scmp.lt.s32.totalorder %s28, 3
      %p342 = pnand %p340, %p341
      %p343 = pneg %p342
      // Predicated region
      $region9: #{tpu_custom_call.1} parent=5 // pred_check
        _
      $region10: #{tpu_custom_call.1} parent=5 // pred_check_branch
        %345 = sbr.rel (%p342) target = $region12
      $region11: #{tpu_custom_call.1} parent=5 // pred_region
        %s346 = ssub.s32 %s28, 1
        // Predicated region
        $region13: #{tpu_custom_call.1} parent=11 // pred_check
          %p347 = pneg %p75
        $region14: #{tpu_custom_call.1} parent=11 // pred_check_branch
          %349 = sbr.rel (%p347) target = $region16
        $region15: #{tpu_custom_call.1} parent=11 // pred_region
          %s351 = ssub.s32 16, 16
          %352 = vsyncadd [#allocation6], %s351
          %s354 = sshll.u32 [#allocation5], 4
          %s355 = int_to_ptr.vmem [resolvable:$true] %s354
          %357 = dma.hbm_to_vmem [thread:$0]  %s1, 16, %s355, [#allocation6]
        $region16: #{tpu_custom_call.1} parent=11 // pred_fallthru
          _
        // Predicated region
        $region17: #{tpu_custom_call.1} parent=11 // pred_check
          %p358 = pneg %p96
        $region18: #{tpu_custom_call.1} parent=11 // pred_check_branch
          %360 = sbr.rel (%p358) target = $region20
        $region19: #{tpu_custom_call.1} parent=11 // pred_region
          %s362 = ssub.s32 16, 16
          %363 = vsyncadd [#allocation6], %s362
          %s365 = sshll.u32 [#allocation7], 4
          %s366 = int_to_ptr.vmem [resolvable:$true] %s365
          %368 = dma.hbm_to_vmem [thread:$0]  %s2, 16, %s366, [#allocation6]
        $region20: #{tpu_custom_call.1} parent=11 // pred_fallthru
          _
        // Predicated region
        $region21: #{tpu_custom_call.1} parent=11 // pred_check
          %p369 = pneg %p117
        $region22: #{tpu_custom_call.1} parent=11 // pred_check_branch
          %371 = sbr.rel (%p369) target = $region24
        $region23: #{tpu_custom_call.1} parent=11 // pred_region
          %s373 = ssub.s32 3072, 3072
          %374 = vsyncadd [#allocation9], %s373
          %s375 = sshll.u32 [#allocation8], 4
          %s376 = int_to_ptr.vmem [resolvable:$true] %s375
          %381 = dma.hbm_to_vmem [thread:$0]  %s3, 3072, %s376, [#allocation9], 192, 192, 12
        $region24: #{tpu_custom_call.1} parent=11 // pred_fallthru
          _
        // Predicated region
        $region25: #{tpu_custom_call.1} parent=11 // pred_check
          %p382 = pneg %p138
        $region26: #{tpu_custom_call.1} parent=11 // pred_check_branch
          %384 = sbr.rel (%p382) target = $region28
        $region27: #{tpu_custom_call.1} parent=11 // pred_region
          _
        $region28: #{tpu_custom_call.1} parent=11 // pred_fallthru
          _
        // Predicated region
        $region29: #{tpu_custom_call.1} parent=11 // pred_check
          %p385 = pneg %p159
        $region30: #{tpu_custom_call.1} parent=11 // pred_check_branch
          %387 = sbr.rel (%p385) target = $region32
        $region31: #{tpu_custom_call.1} parent=11 // pred_region
          %s389 = ssub.s32 1024, 1024
          %390 = vsyncadd [#allocation9], %s389
          %s391 = sshll.u32 [#allocation10], 4
          %s392 = int_to_ptr.vmem [resolvable:$true] %s391
          %397 = dma.hbm_to_vmem [thread:$0]  %s5, 1024, %s392, [#allocation9], 64, 64, 4
        $region32: #{tpu_custom_call.1} parent=11 // pred_fallthru
          _
        // Predicated region
        $region33: #{tpu_custom_call.1} parent=11 // pred_check
          %p398 = pneg %p180
        $region34: #{tpu_custom_call.1} parent=11 // pred_check_branch
          %400 = sbr.rel (%p398) target = $region36
        $region35: #{tpu_custom_call.1} parent=11 // pred_region
          _
        $region36: #{tpu_custom_call.1} parent=11 // pred_fallthru
          _
        // Predicated region
        $region37: #{tpu_custom_call.1} parent=11 // pred_check
          %p401 = pneg %p201
        $region38: #{tpu_custom_call.1} parent=11 // pred_check_branch
          %403 = sbr.rel (%p401) target = $region40
        $region39: #{tpu_custom_call.1} parent=11 // pred_region
          _
        $region40: #{tpu_custom_call.1} parent=11 // pred_fallthru
          _
        // Predicated region
        $region41: #{tpu_custom_call.1} parent=11 // pred_check
          %p404 = pneg %p222
        $region42: #{tpu_custom_call.1} parent=11 // pred_check_branch
          %406 = sbr.rel (%p404) target = $region44
        $region43: #{tpu_custom_call.1} parent=11 // pred_region
          _
        $region44: #{tpu_custom_call.1} parent=11 // pred_fallthru
          _
        // Predicated region
        $region45: #{tpu_custom_call.1} parent=11 // pred_check
          %p407 = pneg %p243
        $region46: #{tpu_custom_call.1} parent=11 // pred_check_branch
          %409 = sbr.rel (%p407) target = $region48
        $region47: #{tpu_custom_call.1} parent=11 // pred_region
          %s411 = ssub.s32 4096, 4096
          %412 = vsyncadd [#allocation12], %s411
          %s413 = sshll.u32 [#allocation11], 4
          %s414 = int_to_ptr.vmem [resolvable:$true] %s413
          %419 = dma.hbm_to_vmem [thread:$0]  %s9, 4096, %s414, [#allocation12], 256, 256, 16
        $region48: #{tpu_custom_call.1} parent=11 // pred_fallthru
          _
        // Predicated region
        $region49: #{tpu_custom_call.1} parent=11 // pred_check
          %p420 = pneg %p264
        $region50: #{tpu_custom_call.1} parent=11 // pred_check_branch
          %422 = sbr.rel (%p420) target = $region52
        $region51: #{tpu_custom_call.1} parent=11 // pred_region
          _
        $region52: #{tpu_custom_call.1} parent=11 // pred_fallthru
          _
        // Predicated region
        $region53: #{tpu_custom_call.1} parent=11 // pred_check
          %p423 = pneg %p285
        $region54: #{tpu_custom_call.1} parent=11 // pred_check_branch
          %425 = sbr.rel (%p423) target = $region56
        $region55: #{tpu_custom_call.1} parent=11 // pred_region
          %s427 = ssub.s32 4096, 4096
          %428 = vsyncadd [#allocation12], %s427
          %s429 = sshll.u32 [#allocation13], 4
          %s430 = int_to_ptr.vmem [resolvable:$true] %s429
          %435 = dma.hbm_to_vmem [thread:$0]  %s11, 4096, %s430, [#allocation12], 64, 64, 4
        $region56: #{tpu_custom_call.1} parent=11 // pred_fallthru
          _
        // Predicated region
        $region57: #{tpu_custom_call.1} parent=11 // pred_check
          %p436 = pneg %p306
        $region58: #{tpu_custom_call.1} parent=11 // pred_check_branch
          %438 = sbr.rel (%p436) target = $region60
        $region59: #{tpu_custom_call.1} parent=11 // pred_region
          _
        $region60: #{tpu_custom_call.1} parent=11 // pred_fallthru
          _
      $region12: #{tpu_custom_call.1} parent=5 // pred_fallthru
        _
      %p439 = scmp.lt.s32.totalorder %s28, 2
      // Predicated region
      $region61: #{tpu_custom_call.1} parent=5 // pred_check
        %p440 = pneg %p439
      $region62: #{tpu_custom_call.1} parent=5 // pred_check_branch
        %442 = sbr.rel (%p440) target = $region64
      $region63: #{tpu_custom_call.1} parent=5 // pred_region
        // Predicated region
        $region65: #{tpu_custom_call.1} parent=63 // pred_check
          %p443 = pneg %p48
        $region66: #{tpu_custom_call.1} parent=63 // pred_check_branch
          %445 = sbr.rel (%p443) target = $region68
        $region67: #{tpu_custom_call.1} parent=63 // pred_region
          %s446 = sand.u32 %s38, 1
          %s447 = scalar_lea.sflag [#allocation3], %s446
          %s448 = sand.u32 %s38, 1
          %s449 = smul.addr %s448, 16
          %s450 = scalar_lea.vmem [#allocation2], %s449
          %s452 = ssub.s32 256, 256
          %453 = vsyncadd %s447, %s452
          %s454 = smul.addr %s28, 2
          %s455 = smul.addr %s454, 128
          %s456 = scalar_lea.hbm %s0, %s455
          %s457 = sshll.u32 %s450, 4
          %s458 = int_to_ptr.vmem [resolvable:$true] %s457
          %463 = dma.hbm_to_vmem [thread:$0]  %s456, 256, %s458, %s447, 128, 128, 8
        $region68: #{tpu_custom_call.1} parent=63 // pred_fallthru
          _
      $region64: #{tpu_custom_call.1} parent=5 // pred_fallthru
        _
      %p464 = scmp.le.s32.totalorder 1, %s28
      %p465 = scmp.lt.s32.totalorder %s28, 3
      %p466 = pnand %p464, %p465
      %p467 = pneg %p466
      // Predicated region
      $region69: #{tpu_custom_call.1} parent=5 // pred_check
        _
      $region70: #{tpu_custom_call.1} parent=5 // pred_check_branch
        %469 = sbr.rel (%p466) target = $region72
      $region71: #{tpu_custom_call.1} parent=5 // pred_region
        %s470 = ssub.s32 %s28, 1
        %s471 = sand.u32 %s41, 1
        %s472 = scalar_lea.sflag [#allocation3], %s471
        %s473 = sand.u32 %s41, 1
        %s474 = smul.addr %s473, 16
        %s475 = scalar_lea.vmem [#allocation2], %s474
        // Predicated region
        $region73: #{tpu_custom_call.1} parent=71 // pred_check
          %p476 = pneg %p54
        $region74: #{tpu_custom_call.1} parent=71 // pred_check_branch
          %478 = sbr.rel (%p476) target = $region76
        $region75: #{tpu_custom_call.1} parent=71 // pred_region
          %479 = dma.done %s472, 256
        $region76: #{tpu_custom_call.1} parent=71 // pred_fallthru
          _
        // Predicated region
        $region77: #{tpu_custom_call.1} parent=71 // pred_check
          %p480 = pneg %p75
        $region78: #{tpu_custom_call.1} parent=71 // pred_check_branch
          %482 = sbr.rel (%p480) target = $region80
        $region79: #{tpu_custom_call.1} parent=71 // pred_region
          %483 = dma.done [#allocation6], 16
        $region80: #{tpu_custom_call.1} parent=71 // pred_fallthru
          _
        // Predicated region
        $region81: #{tpu_custom_call.1} parent=71 // pred_check
          %p484 = pneg %p96
        $region82: #{tpu_custom_call.1} parent=71 // pred_check_branch
          %486 = sbr.rel (%p484) target = $region84
        $region83: #{tpu_custom_call.1} parent=71 // pred_region
          %487 = dma.done [#allocation6], 16
        $region84: #{tpu_custom_call.1} parent=71 // pred_fallthru
          _
        // Predicated region
        $region85: #{tpu_custom_call.1} parent=71 // pred_check
          %p488 = pneg %p117
        $region86: #{tpu_custom_call.1} parent=71 // pred_check_branch
          %490 = sbr.rel (%p488) target = $region88
        $region87: #{tpu_custom_call.1} parent=71 // pred_region
          %491 = dma.done [#allocation9], 3072
        $region88: #{tpu_custom_call.1} parent=71 // pred_fallthru
          _
        // Predicated region
        $region89: #{tpu_custom_call.1} parent=71 // pred_check
          %p492 = pneg %p159
        $region90: #{tpu_custom_call.1} parent=71 // pred_check_branch
          %494 = sbr.rel (%p492) target = $region92
        $region91: #{tpu_custom_call.1} parent=71 // pred_region
          %495 = dma.done [#allocation9], 1024
        $region92: #{tpu_custom_call.1} parent=71 // pred_fallthru
          _
        // Predicated region
        $region93: #{tpu_custom_call.1} parent=71 // pred_check
          %p496 = pneg %p243
        $region94: #{tpu_custom_call.1} parent=71 // pred_check_branch
          %498 = sbr.rel (%p496) target = $region96
        $region95: #{tpu_custom_call.1} parent=71 // pred_region
          %499 = dma.done [#allocation12], 4096
        $region96: #{tpu_custom_call.1} parent=71 // pred_fallthru
          _
        // Predicated region
        $region97: #{tpu_custom_call.1} parent=71 // pred_check
          %p500 = pneg %p285
        $region98: #{tpu_custom_call.1} parent=71 // pred_check_branch
          %502 = sbr.rel (%p500) target = $region100
        $region99: #{tpu_custom_call.1} parent=71 // pred_region
          %503 = dma.done [#allocation12], 4096
        $region100: #{tpu_custom_call.1} parent=71 // pred_fallthru
          _
        %s504 = sand.u32 %s41, 1
        %s505 = scalar_lea.sflag [#allocation3], %s504
        %s506 = sand.u32 %s41, 1
        %s507 = smul.addr %s506, 16
        %s508 = scalar_lea.vmem [#allocation2], %s507
        %p509 = pneg %p54
        %p510 = pneg %p51
        %p511 = pneg %p75
        %p512 = pneg %p72
        %p513 = pneg %p96
        %p514 = pneg %p93
        %p515 = pneg %p117
        %p516 = pneg %p114
        %p517 = pneg %p138
        %p518 = pneg %p135
        %p519 = pneg %p159
        %p520 = pneg %p156
        %p521 = pneg %p180
        %p522 = pneg %p177
        %p523 = pneg %p201
        %p524 = pneg %p198
        %p525 = pneg %p222
        %p526 = pneg %p219
        %p527 = pneg %p243
        %p528 = pneg %p240
        %p529 = pneg %p264
        %p530 = pneg %p261
        %p531 = pneg %p285
        %p532 = pneg %p282
        %p533 = pneg %p306
        %p534 = pneg %p303
        %p535 = pneg %p332
        %p536 = pneg %p329
        %s537 = sand.u32 %s319, 1
        %s538 = scalar_lea.sflag [#allocation4], %s537
        %s539 = sand.u32 %s319, 1
        %s540 = smul.addr %s539, 16
        %s541 = scalar_lea.vmem [#allocation14], %s540
        %v543 = vld [vmem:[%s475] sm:$0xff]
        %v544 = vld [vmem:[%s475 + $0x8] sm:$0xff]
        %v545 = vld [vmem:[#allocation5] sm:$0x1]
        %v546 = vld [vmem:[#allocation7] sm:$0x1]
        %547 = vadd.xlane.f32.xlu0 %v543
        %v548 = vpop.xlane.xlu0 %547
        %549 = vadd.xlane.f32.xlu0 %v544
        %v550 = vpop.xlane.xlu0 %549
        %v551 = vrcp.pop 128.0
        %v552 = vmul.f32 %v548, %v551
        %v553 = vmul.f32 %v550, %v551
        %v554 = vsub.f32 %v543, %v552
        %v555 = vsub.f32 %v544, %v553
        %v556 = vmul.f32 %v554, %v554
        %v557 = vmul.f32 %v555, %v555
        %558 = vadd.xlane.f32.xlu0 %v556
        %v559 = vpop.xlane.xlu0 %558
        %560 = vadd.xlane.f32.xlu0 %v557
        %v561 = vpop.xlane.xlu0 %560
        %v562 = vmul.f32 %v559, %v551
        %v563 = vmul.f32 %v561, %v551
        %v564 = vadd.f32 %v562, 1e-05
        %v565 = vadd.f32 %v563, 1e-05
        %v566 = vrsqrt.pop %v564
        %v567 = vrsqrt.pop %v565
        %v568 = vmul.f32 %v554, %v566
        %v569 = vmul.f32 %v555, %v567
        %v571 = vlaneseq
        %v572 = vshrl.u32 %v571, 7
        %v573 = vsub.s32 0, %v572
        %v574 = vrot.slane %v545, %v573
        %v576 = vmul.f32 %v568, %v574
        %v577 = vmul.f32 %v569, %v574
        %v579 = vlaneseq
        %v580 = vshrl.u32 %v579, 7
        %v581 = vsub.s32 0, %v580
        %v582 = vrot.slane %v546, %v581
        %v584 = vadd.f32 %v576, %v582
        %v585 = vadd.f32 %v577, %v582
        %v586 = vpack.c.bf16 %v585, %v584
        %v587 = vld [vmem:[#allocation8] sm:$0xff]
        %v588 = vld [vmem:[#allocation8 + $0x8] sm:$0xf]
        %v589 = vld [vmem:[#allocation8 + $0xc] sm:$0xff]
        %v590 = vld [vmem:[#allocation8 + $0x14] sm:$0xf]
        %v591 = vld [vmem:[#allocation8 + $0x18] sm:$0xff]
        %v592 = vld [vmem:[#allocation8 + $0x20] sm:$0xf]
        %v593 = vld [vmem:[#allocation8 + $0x24] sm:$0xff]
        %v594 = vld [vmem:[#allocation8 + $0x2c] sm:$0xf]
        %v595 = vld [vmem:[#allocation8 + $0x30] sm:$0xff]
        %v596 = vld [vmem:[#allocation8 + $0x38] sm:$0xf]
        %v597 = vld [vmem:[#allocation8 + $0x3c] sm:$0xff]
        %v598 = vld [vmem:[#allocation8 + $0x44] sm:$0xf]
        %v599 = vld [vmem:[#allocation8 + $0x48] sm:$0xff]
        %v600 = vld [vmem:[#allocation8 + $0x50] sm:$0xf]
        %v601 = vld [vmem:[#allocation8 + $0x54] sm:$0xff]
        %v602 = vld [vmem:[#allocation8 + $0x5c] sm:$0xf]
        %v603 = vld [vmem:[#allocation8 + $0x60] sm:$0xff]
        %v604 = vld [vmem:[#allocation8 + $0x68] sm:$0xf]
        %v605 = vld [vmem:[#allocation8 + $0x6c] sm:$0xff]
        %v606 = vld [vmem:[#allocation8 + $0x74] sm:$0xf]
        %v607 = vld [vmem:[#allocation8 + $0x78] sm:$0xff]
        %v608 = vld [vmem:[#allocation8 + $0x80] sm:$0xf]
        %v609 = vld [vmem:[#allocation8 + $0x84] sm:$0xff]
        %v610 = vld [vmem:[#allocation8 + $0x8c] sm:$0xf]
        %v611 = vld [vmem:[#allocation8 + $0x90] sm:$0xff]
        %v612 = vld [vmem:[#allocation8 + $0x98] sm:$0xf]
        %v613 = vld [vmem:[#allocation8 + $0x9c] sm:$0xff]
        %v614 = vld [vmem:[#allocation8 + $0xa4] sm:$0xf]
        %v615 = vld [vmem:[#allocation8 + $0xa8] sm:$0xff]
        %v616 = vld [vmem:[#allocation8 + $0xb0] sm:$0xf]
        %v617 = vld [vmem:[#allocation8 + $0xb4] sm:$0xff]
        %v618 = vld [vmem:[#allocation8 + $0xbc] sm:$0xf]
        %v619 = vld [vmem:[%s4] sm:$0x7]
        %v621 = vlaneseq
        %v622 = vshrl.u32 %v621, 7
        %v623 = vsub.s32 0, %v622
        %v624 = vrot.slane %v619, %v623
        %v625 = vlaneseq
        %v626 = vshrl.u32 %v625, 7
        %v627 = vsub.s32 1, %v626
        %v628 = vrot.slane %v619, %v627
        %v629 = vlaneseq
        %v630 = vshrl.u32 %v629, 7
        %v631 = vsub.s32 2, %v630
        %v632 = vrot.slane %v619, %v631
        %v668 = vunpack.c.l.b16 %v587
        %v669 = vunpack.c.h.b16 %v587
        %v670 = vunpack.c.l.b16 %v588
        %v671 = vunpack.c.l.b16 %v589
        %v672 = vunpack.c.h.b16 %v589
        %v673 = vunpack.c.l.b16 %v590
        %v674 = vunpack.c.l.b16 %v591
        %v675 = vunpack.c.h.b16 %v591
        %v676 = vunpack.c.l.b16 %v592
        %v677 = vunpack.c.l.b16 %v593
        %v678 = vunpack.c.h.b16 %v593
        %v679 = vunpack.c.l.b16 %v594
        %v680 = vunpack.c.l.b16 %v595
        %v681 = vunpack.c.h.b16 %v595
        %v682 = vunpack.c.l.b16 %v596
        %v683 = vunpack.c.l.b16 %v597
        %v684 = vunpack.c.h.b16 %v597
        %v685 = vunpack.c.l.b16 %v598
        %v686 = vunpack.c.l.b16 %v599
        %v687 = vunpack.c.h.b16 %v599
        %v688 = vunpack.c.l.b16 %v600
        %v689 = vunpack.c.l.b16 %v601
        %v690 = vunpack.c.h.b16 %v601
        %v691 = vunpack.c.l.b16 %v602
        %v692 = vunpack.c.l.b16 %v603
        %v693 = vunpack.c.h.b16 %v603
        %v694 = vunpack.c.l.b16 %v604
        %v695 = vunpack.c.l.b16 %v605
        %v696 = vunpack.c.h.b16 %v605
        %v697 = vunpack.c.l.b16 %v606
        %v698 = vunpack.c.l.b16 %v607
        %v699 = vunpack.c.h.b16 %v607
        %v700 = vunpack.c.l.b16 %v608
        %v701 = vunpack.c.l.b16 %v609
        %v702 = vunpack.c.h.b16 %v609
        %v703 = vunpack.c.l.b16 %v610
        %v704 = vunpack.c.l.b16 %v611
        %v705 = vunpack.c.h.b16 %v611
        %v706 = vunpack.c.l.b16 %v612
        %v707 = vunpack.c.l.b16 %v613
        %v708 = vunpack.c.h.b16 %v613
        %v709 = vunpack.c.l.b16 %v614
        %v710 = vunpack.c.l.b16 %v615
        %v711 = vunpack.c.h.b16 %v615
        %v712 = vunpack.c.l.b16 %v616
        %v713 = vunpack.c.l.b16 %v617
        %v714 = vunpack.c.h.b16 %v617
        %v715 = vunpack.c.l.b16 %v618
        %v716 = vpack.c.b16 %v671, %v668
        %v717 = vpack.c.b16 %v672, %v669
        %v718 = vpack.c.b16 %v673, %v670
        %v719 = vpack.c.b16 %v677, %v674
        %v720 = vpack.c.b16 %v678, %v675
        %v721 = vpack.c.b16 %v679, %v676
        %v722 = vpack.c.b16 %v683, %v680
        %v723 = vpack.c.b16 %v684, %v681
        %v724 = vpack.c.b16 %v685, %v682
        %v725 = vpack.c.b16 %v689, %v686
        %v726 = vpack.c.b16 %v690, %v687
        %v727 = vpack.c.b16 %v691, %v688
        %v728 = vpack.c.b16 %v695, %v692
        %v729 = vpack.c.b16 %v696, %v693
        %v730 = vpack.c.b16 %v697, %v694
        %v731 = vpack.c.b16 %v701, %v698
        %v732 = vpack.c.b16 %v702, %v699
        %v733 = vpack.c.b16 %v703, %v700
        %v734 = vpack.c.b16 %v707, %v704
        %v735 = vpack.c.b16 %v708, %v705
        %v736 = vpack.c.b16 %v709, %v706
        %v737 = vpack.c.b16 %v713, %v710
        %v738 = vpack.c.b16 %v714, %v711
        %v739 = vpack.c.b16 %v715, %v712
        %764 = vmatprep.subr.bf16.mxu0 %v717
        %765 = vmatpush1.bf16.msra.mxu0 %v716
        %766 = vmatprep.subr.bf16.mxu0 %v720
        %767 = vmatpush1.bf16.msra.mxu0 %v719
        %768 = vmatprep.subr.bf16.mxu0 %v723
        %769 = vmatpush1.bf16.msra.mxu0 %v722
        %770 = vmatprep.subr.bf16.mxu0 %v726
        %771 = vmatpush1.bf16.msra.mxu0 %v725
        %772 = vmatprep.subr.bf16.mxu0 %v729
        %773 = vmatpush1.bf16.msra.mxu0 %v728
        %774 = vmatprep.subr.bf16.mxu0 %v732
        %775 = vmatpush1.bf16.msra.mxu0 %v731
        %776 = vmatprep.subr.bf16.mxu0 %v735
        %777 = vmatpush1.bf16.msra.mxu0 %v734
        %778 = vmatprep.subr.bf16.mxu0 %v738
        %779 = vmatpush1.bf16.msra.mxu0 %v737
        %780 = vmatprep.subr.bf16.mxu0 0
        %781 = vmatpush1.bf16.msra.mxu0 0
        %782 = vmatprep.subr.bf16.mxu0 0
        %783 = vmatpush1.bf16.msra.mxu0 0
        %784 = vmatprep.subr.bf16.mxu0 0
        %785 = vmatpush1.bf16.msra.mxu0 0
        %786 = vmatprep.subr.bf16.mxu0 0
        %787 = vmatpush1.bf16.msra.mxu0 0
        %788 = vmatprep.subr.bf16.mxu0 0
        %789 = vmatpush1.bf16.msra.mxu0 0
        %790 = vmatprep.subr.bf16.mxu0 0
        %791 = vmatpush1.bf16.msra.mxu0 0
        %792 = vmatprep.subr.bf16.mxu0 0
        %793 = vmatpush1.bf16.msra.mxu0 0
        %794 = vmatprep.subr.bf16.mxu0 0
        %795 = vmatpush1.bf16.msra.mxu0 0
        %796 = vmatprep.mubr.bf16.mxu0 0
        %797 = vmatmul.mubr.bf16.gmra.mrb[0].mxu0 %v586
        %v798 = vpop.f32.mrb[0].mxu0
        %v799 = vadd.f32 %v624, %v798
        %v800 = vpop.f32.mrb[0].mxu0
        %v801 = vadd.f32 %v628, %v800
        %v802 = vpop.f32.mrb[0].mxu0
        %v803 = vadd.f32 %v624, %v802
        %v804 = vpop.f32.mrb[0].mxu0
        %v805 = vadd.f32 %v628, %v804
        %806 = vdwg.mxu0
        %807 = vmatprep.subr.bf16.mxu0 0
        %808 = vmatpush1.bf16.msra.mxu0 %v718
        %809 = vmatprep.subr.bf16.mxu0 0
        %810 = vmatpush1.bf16.msra.mxu0 %v721
        %811 = vmatprep.subr.bf16.mxu0 0
        %812 = vmatpush1.bf16.msra.mxu0 %v724
        %813 = vmatprep.subr.bf16.mxu0 0
        %814 = vmatpush1.bf16.msra.mxu0 %v727
        %815 = vmatprep.subr.bf16.mxu0 0
        %816 = vmatpush1.bf16.msra.mxu0 %v730
        %817 = vmatprep.subr.bf16.mxu0 0
        %818 = vmatpush1.bf16.msra.mxu0 %v733
        %819 = vmatprep.subr.bf16.mxu0 0
        %820 = vmatpush1.bf16.msra.mxu0 %v736
        %821 = vmatprep.subr.bf16.mxu0 0
        %822 = vmatpush1.bf16.msra.mxu0 %v739
        %823 = vmatprep.subr.bf16.mxu0 0
        %824 = vmatpush1.bf16.msra.mxu0 0
        %825 = vmatprep.subr.bf16.mxu0 0
        %826 = vmatpush1.bf16.msra.mxu0 0
        %827 = vmatprep.subr.bf16.mxu0 0
        %828 = vmatpush1.bf16.msra.mxu0 0
        %829 = vmatprep.subr.bf16.mxu0 0
        %830 = vmatpush1.bf16.msra.mxu0 0
        %831 = vmatprep.subr.bf16.mxu0 0
        %832 = vmatpush1.bf16.msra.mxu0 0
        %833 = vmatprep.subr.bf16.mxu0 0
        %834 = vmatpush1.bf16.msra.mxu0 0
        %835 = vmatprep.subr.bf16.mxu0 0
        %836 = vmatpush1.bf16.msra.mxu0 0
        %837 = vmatprep.subr.bf16.mxu0 0
        %838 = vmatpush1.bf16.msra.mxu0 0
        %839 = vmatprep.mubr.bf16.mxu0 0
        %840 = vmatmul.mubr.bf16.gmra.mrb[0].mxu0 %v586
        %v841 = vpop.f32.mrb[0].mxu0
        %v842 = vadd.f32 %v632, %v841
        %v843 = vpop.f32.mrb[0].mxu0
        %v844 = vpop.f32.mrb[0].mxu0
        %v845 = vadd.f32 %v632, %v844
        %v846 = vpop.f32.mrb[0].mxu0
        %847 = vdwg.mxu0
        %v848 = vpack.c.bf16 %v803, %v799
        %v849 = vpack.c.bf16 %v805, %v801
        %v850 = vpack.c.bf16 %v845, %v842
        %v851 = vlaneseq
        %v852 = vshrl.u32 %v851, 7
        %v853 = vadd.s32 %v852, 8
        %v854 = vlaneseq
        %v855 = vand.u32 %v854, 127
        %vm856 = vcmp.ge.s32.totalorder %v852, %v855
        %vm857 = vcmp.ge.s32.totalorder %v853, %v855
        %859 = vrot.lane.b32.xlu0 %v848, 96
        %v860 = vpop.permute.xlu0 %859
        %861 = vrot.lane.b32.xlu0 %v848, 64
        %v862 = vpop.permute.xlu0 %861
        %863 = vrot.lane.b32.xlu0 %v848, 32
        %v864 = vpop.permute.xlu0 %863
        %866 = vrot.lane.b32.xlu0 %v849, 96
        %v867 = vpop.permute.xlu0 %866
        %868 = vrot.lane.b32.xlu0 %v849, 64
        %v869 = vpop.permute.xlu0 %868
        %870 = vrot.lane.b32.xlu0 %v849, 32
        %v871 = vpop.permute.xlu0 %870
        %873 = vrot.lane.b32.xlu0 %v850, 96
        %v874 = vpop.permute.xlu0 %873
        %876 = vrot.lane.b32.xlu0 %v850, 64
        %v877 = vpop.permute.xlu0 %876
        %879 = vrot.lane.b32.xlu0 %v850, 32
        %v880 = vpop.permute.xlu0 %879
        %vm882 = vcmask 261120
        %v884 = vsel %vm882, %v848, 0
        %v887 = vsel %vm882, %v849, 0
        %889 = vmatprep.subr.bf16.mxu0 0
        %890 = vmatpush1.bf16.xpose.msra.mxu0 %v887
        %891 = vmatprep.subr.bf16.mxu0 0
        %892 = vmatpush1.bf16.xpose.msra.mxu0 0
        %893 = vmatprep.subr.bf16.mxu0 0
        %894 = vmatpush1.bf16.xpose.msra.mxu0 0
        %895 = vmatprep.subr.bf16.mxu0 0
        %896 = vmatpush1.bf16.xpose.msra.mxu0 0
        %897 = vmatprep.subr.bf16.mxu0 0
        %898 = vmatpush1.bf16.xpose.msra.mxu0 0
        %899 = vmatprep.subr.bf16.mxu0 0
        %900 = vmatpush1.bf16.xpose.msra.mxu0 0
        %901 = vmatprep.subr.bf16.mxu0 0
        %902 = vmatpush1.bf16.xpose.msra.mxu0 0
        %903 = vmatprep.subr.bf16.mxu0 0
        %904 = vmatpush1.bf16.xpose.msra.mxu0 0
        %905 = vmatprep.subr.bf16.mxu0 0
        %906 = vmatpush1.bf16.xpose.msra.mxu0 0
        %907 = vmatprep.subr.bf16.mxu0 0
        %908 = vmatpush1.bf16.xpose.msra.mxu0 0
        %909 = vmatprep.subr.bf16.mxu0 0
        %910 = vmatpush1.bf16.xpose.msra.mxu0 0
        %911 = vmatprep.subr.bf16.mxu0 0
        %912 = vmatpush1.bf16.xpose.msra.mxu0 0
        %913 = vmatprep.subr.bf16.mxu0 0
        %914 = vmatpush1.bf16.xpose.msra.mxu0 0
        %915 = vmatprep.subr.bf16.mxu0 0
        %916 = vmatpush1.bf16.xpose.msra.mxu0 0
        %917 = vmatprep.subr.bf16.mxu0 0
        %918 = vmatpush1.bf16.xpose.msra.mxu0 0
        %919 = vmatprep.subr.bf16.mxu0 0
        %920 = vmatpush1.bf16.xpose.msra.mxu0 0
        %921 = vmatprep.mubr.bf16.mxu0 0
        %922 = vmatmul.mubr.bf16.gmra.mrb[0].mxu0 %v884
        %v923 = vpop.f32.mrb[0].mxu0
        %v924 = vadd.f32 0.0, %v923
        %v925 = vpop.f32.mrb[0].mxu0
        %v926 = vpop.f32.mrb[0].mxu0
        %v927 = vadd.f32 0.0, %v926
        %v928 = vpop.f32.mrb[0].mxu0
        %929 = vdwg.mxu0
        %v931 = vsel %vm882, %v860, 0
        %v934 = vsel %vm882, %v867, 0
        %936 = vmatprep.subr.bf16.mxu0 0
        %937 = vmatpush1.bf16.xpose.msra.mxu0 %v934
        %938 = vmatprep.subr.bf16.mxu0 0
        %939 = vmatpush1.bf16.xpose.msra.mxu0 0
        %940 = vmatprep.subr.bf16.mxu0 0
        %941 = vmatpush1.bf16.xpose.msra.mxu0 0
        %942 = vmatprep.subr.bf16.mxu0 0
        %943 = vmatpush1.bf16.xpose.msra.mxu0 0
        %944 = vmatprep.subr.bf16.mxu0 0
        %945 = vmatpush1.bf16.xpose.msra.mxu0 0
        %946 = vmatprep.subr.bf16.mxu0 0
        %947 = vmatpush1.bf16.xpose.msra.mxu0 0
        %948 = vmatprep.subr.bf16.mxu0 0
        %949 = vmatpush1.bf16.xpose.msra.mxu0 0
        %950 = vmatprep.subr.bf16.mxu0 0
        %951 = vmatpush1.bf16.xpose.msra.mxu0 0
        %952 = vmatprep.subr.bf16.mxu0 0
        %953 = vmatpush1.bf16.xpose.msra.mxu0 0
        %954 = vmatprep.subr.bf16.mxu0 0
        %955 = vmatpush1.bf16.xpose.msra.mxu0 0
        %956 = vmatprep.subr.bf16.mxu0 0
        %957 = vmatpush1.bf16.xpose.msra.mxu0 0
        %958 = vmatprep.subr.bf16.mxu0 0
        %959 = vmatpush1.bf16.xpose.msra.mxu0 0
        %960 = vmatprep.subr.bf16.mxu0 0
        %961 = vmatpush1.bf16.xpose.msra.mxu0 0
        %962 = vmatprep.subr.bf16.mxu0 0
        %963 = vmatpush1.bf16.xpose.msra.mxu0 0
        %964 = vmatprep.subr.bf16.mxu0 0
        %965 = vmatpush1.bf16.xpose.msra.mxu0 0
        %966 = vmatprep.subr.bf16.mxu0 0
        %967 = vmatpush1.bf16.xpose.msra.mxu0 0
        %968 = vmatprep.mubr.bf16.mxu0 0
        %969 = vmatmul.mubr.bf16.gmra.mrb[0].mxu0 %v931
        %v970 = vpop.f32.mrb[0].mxu0
        %v971 = vadd.f32 0.0, %v970
        %v972 = vpop.f32.mrb[0].mxu0
        %v973 = vpop.f32.mrb[0].mxu0
        %v974 = vadd.f32 0.0, %v973
        %v975 = vpop.f32.mrb[0].mxu0
        %976 = vdwg.mxu0
        %v978 = vsel %vm882, %v862, 0
        %v981 = vsel %vm882, %v869, 0
        %983 = vmatprep.subr.bf16.mxu0 0
        %984 = vmatpush1.bf16.xpose.msra.mxu0 %v981
        %985 = vmatprep.subr.bf16.mxu0 0
        %986 = vmatpush1.bf16.xpose.msra.mxu0 0
        %987 = vmatprep.subr.bf16.mxu0 0
        %988 = vmatpush1.bf16.xpose.msra.mxu0 0
        %989 = vmatprep.subr.bf16.mxu0 0
        %990 = vmatpush1.bf16.xpose.msra.mxu0 0
        %991 = vmatprep.subr.bf16.mxu0 0
        %992 = vmatpush1.bf16.xpose.msra.mxu0 0
        %993 = vmatprep.subr.bf16.mxu0 0
        %994 = vmatpush1.bf16.xpose.msra.mxu0 0
        %995 = vmatprep.subr.bf16.mxu0 0
        %996 = vmatpush1.bf16.xpose.msra.mxu0 0
        %997 = vmatprep.subr.bf16.mxu0 0
        %998 = vmatpush1.bf16.xpose.msra.mxu0 0
        %999 = vmatprep.subr.bf16.mxu0 0
        %1000 = vmatpush1.bf16.xpose.msra.mxu0 0
        %1001 = vmatprep.subr.bf16.mxu0 0
        %1002 = vmatpush1.bf16.xpose.msra.mxu0 0
        %1003 = vmatprep.subr.bf16.mxu0 0
        %1004 = vmatpush1.bf16.xpose.msra.mxu0 0
        %1005 = vmatprep.subr.bf16.mxu0 0
        %1006 = vmatpush1.bf16.xpose.msra.mxu0 0
        %1007 = vmatprep.subr.bf16.mxu0 0
        %1008 = vmatpush1.bf16.xpose.msra.mxu0 0
        %1009 = vmatprep.subr.bf16.mxu0 0
        %1010 = vmatpush1.bf16.xpose.msra.mxu0 0
        %1011 = vmatprep.subr.bf16.mxu0 0
        %1012 = vmatpush1.bf16.xpose.msra.mxu0 0
        %1013 = vmatprep.subr.bf16.mxu0 0
        %1014 = vmatpush1.bf16.xpose.msra.mxu0 0
        %1015 = vmatprep.mubr.bf16.mxu0 0
        %1016 = vmatmul.mubr.bf16.gmra.mrb[0].mxu0 %v978
        %v1017 = vpop.f32.mrb[0].mxu0
        %v1018 = vadd.f32 0.0, %v1017
        %v1019 = vpop.f32.mrb[0].mxu0
        %v1020 = vpop.f32.mrb[0].mxu0
        %v1021 = vadd.f32 0.0, %v1020
        %v1022 = vpop.f32.mrb[0].mxu0
        %1023 = vdwg.mxu0
        %v1025 = vsel %vm882, %v864, 0
        %v1028 = vsel %vm882, %v871, 0
        %1030 = vmatprep.subr.bf16.mxu0 0
        %1031 = vmatpush1.bf16.xpose.msra.mxu0 %v1028
        %1032 = vmatprep.subr.bf16.mxu0 0
        %1033 = vmatpush1.bf16.xpose.msra.mxu0 0
        %1034 = vmatprep.subr.bf16.mxu0 0
        %1035 = vmatpush1.bf16.xpose.msra.mxu0 0
        %1036 = vmatprep.subr.bf16.mxu0 0
        %1037 = vmatpush1.bf16.xpose.msra.mxu0 0
        %1038 = vmatprep.subr.bf16.mxu0 0
        %1039 = vmatpush1.bf16.xpose.msra.mxu0 0
        %1040 = vmatprep.subr.bf16.mxu0 0
        %1041 = vmatpush1.bf16.xpose.msra.mxu0 0
        %1042 = vmatprep.subr.bf16.mxu0 0
        %1043 = vmatpush1.bf16.xpose.msra.mxu0 0
        %1044 = vmatprep.subr.bf16.mxu0 0
        %1045 = vmatpush1.bf16.xpose.msra.mxu0 0
        %1046 = vmatprep.subr.bf16.mxu0 0
        %1047 = vmatpush1.bf16.xpose.msra.mxu0 0
        %1048 = vmatprep.subr.bf16.mxu0 0
        %1049 = vmatpush1.bf16.xpose.msra.mxu0 0
        %1050 = vmatprep.subr.bf16.mxu0 0
        %1051 = vmatpush1.bf16.xpose.msra.mxu0 0
        %1052 = vmatprep.subr.bf16.mxu0 0
        %1053 = vmatpush1.bf16.xpose.msra.mxu0 0
        %1054 = vmatprep.subr.bf16.mxu0 0
        %1055 = vmatpush1.bf16.xpose.msra.mxu0 0
        %1056 = vmatprep.subr.bf16.mxu0 0
        %1057 = vmatpush1.bf16.xpose.msra.mxu0 0
        %1058 = vmatprep.subr.bf16.mxu0 0
        %1059 = vmatpush1.bf16.xpose.msra.mxu0 0
        %1060 = vmatprep.subr.bf16.mxu0 0
        %1061 = vmatpush1.bf16.xpose.msra.mxu0 0
        %1062 = vmatprep.mubr.bf16.mxu0 0
        %1063 = vmatmul.mubr.bf16.gmra.mrb[0].mxu0 %v1025
        %v1064 = vpop.f32.mrb[0].mxu0
        %v1065 = vadd.f32 0.0, %v1064
        %v1066 = vpop.f32.mrb[0].mxu0
        %v1067 = vpop.f32.mrb[0].mxu0
        %v1068 = vadd.f32 0.0, %v1067
        %v1069 = vpop.f32.mrb[0].mxu0
        %1070 = vdwg.mxu0
        %v1071 = vsel %vm856, 1, 0
        %v1072 = vsel %vm857, 1, 0
        %vm1073 = vcmp.eq.s32.totalorder %v1071, 1
        %vm1074 = vcmp.eq.s32.totalorder %v1072, 1
        %v1075 = vsel %vm1073, %v924, -1e+30
        %v1076 = vsel %vm1074, %v927, -1e+30
        %v1077 = vsel %vm1073, %v971, -1e+30
        %v1078 = vsel %vm1074, %v974, -1e+30
        %v1079 = vsel %vm1073, %v1018, -1e+30
        %v1080 = vsel %vm1074, %v1021, -1e+30
        %v1081 = vsel %vm1073, %v1065, -1e+30
        %v1082 = vsel %vm1074, %v1068, -1e+30
        %vm1083 = vcmask 130048
        %v1084 = vsel %vm1083, %v1075, -inf
        %1085 = vmax.xlane.f32.xlu0 %v1084
        %v1086 = vpop.xlane.xlu0 %1085
        %v1087 = vsel %vm1083, %v1076, -inf
        %1088 = vmax.xlane.f32.xlu0 %v1087
        %v1089 = vpop.xlane.xlu0 %1088
        %v1090 = vsel %vm1083, %v1077, -inf
        %1091 = vmax.xlane.f32.xlu0 %v1090
        %v1092 = vpop.xlane.xlu0 %1091
        %v1093 = vsel %vm1083, %v1078, -inf
        %1094 = vmax.xlane.f32.xlu0 %v1093
        %v1095 = vpop.xlane.xlu0 %1094
        %v1096 = vsel %vm1083, %v1079, -inf
        %1097 = vmax.xlane.f32.xlu0 %v1096
        %v1098 = vpop.xlane.xlu0 %1097
        %v1099 = vsel %vm1083, %v1080, -inf
        %1100 = vmax.xlane.f32.xlu0 %v1099
        %v1101 = vpop.xlane.xlu0 %1100
        %v1102 = vsel %vm1083, %v1081, -inf
        %1103 = vmax.xlane.f32.xlu0 %v1102
        %v1104 = vpop.xlane.xlu0 %1103
        %v1105 = vsel %vm1083, %v1082, -inf
        %1106 = vmax.xlane.f32.xlu0 %v1105
        %v1107 = vpop.xlane.xlu0 %1106
        %v1108 = vsub.f32 %v1075, %v1086
        %v1109 = vsub.f32 %v1076, %v1089
        %v1110 = vsub.f32 %v1077, %v1092
        %v1111 = vsub.f32 %v1078, %v1095
        %v1112 = vsub.f32 %v1079, %v1098
        %v1113 = vsub.f32 %v1080, %v1101
        %v1114 = vsub.f32 %v1081, %v1104
        %v1115 = vsub.f32 %v1082, %v1107
        %v1116 = vmul.f32 %v1108, 1.442695
        %v1117 = vpow.pop %v1116
        %v1118 = vmul.f32 %v1109, 1.442695
        %v1119 = vpow.pop %v1118
        %v1120 = vmul.f32 %v1110, 1.442695
        %v1121 = vpow.pop %v1120
        %v1122 = vmul.f32 %v1111, 1.442695
        %v1123 = vpow.pop %v1122
        %v1124 = vmul.f32 %v1112, 1.442695
        %v1125 = vpow.pop %v1124
        %v1126 = vmul.f32 %v1113, 1.442695
        %v1127 = vpow.pop %v1126
        %v1128 = vmul.f32 %v1114, 1.442695
        %v1129 = vpow.pop %v1128
        %v1130 = vmul.f32 %v1115, 1.442695
        %v1131 = vpow.pop %v1130
        %v1132 = vsel %vm1083, %v1117, 0.0
        %1133 = vadd.xlane.f32.xlu0 %v1132
        %v1134 = vpop.xlane.xlu0 %1133
        %v1135 = vsel %vm1083, %v1119, 0.0
        %1136 = vadd.xlane.f32.xlu0 %v1135
        %v1137 = vpop.xlane.xlu0 %1136
        %v1138 = vsel %vm1083, %v1121, 0.0
        %1139 = vadd.xlane.f32.xlu0 %v1138
        %v1140 = vpop.xlane.xlu0 %1139
        %v1141 = vsel %vm1083, %v1123, 0.0
        %1142 = vadd.xlane.f32.xlu0 %v1141
        %v1143 = vpop.xlane.xlu0 %1142
        %v1144 = vsel %vm1083, %v1125, 0.0
        %1145 = vadd.xlane.f32.xlu0 %v1144
        %v1146 = vpop.xlane.xlu0 %1145
        %v1147 = vsel %vm1083, %v1127, 0.0
        %1148 = vadd.xlane.f32.xlu0 %v1147
        %v1149 = vpop.xlane.xlu0 %1148
        %v1150 = vsel %vm1083, %v1129, 0.0
        %1151 = vadd.xlane.f32.xlu0 %v1150
        %v1152 = vpop.xlane.xlu0 %1151
        %v1153 = vsel %vm1083, %v1131, 0.0
        %1154 = vadd.xlane.f32.xlu0 %v1153
        %v1155 = vpop.xlane.xlu0 %1154
        %v1156 = vrcp.pop %v1134
        %v1157 = vrcp.pop %v1137
        %v1158 = vrcp.pop %v1140
        %v1159 = vrcp.pop %v1143
        %v1160 = vrcp.pop %v1146
        %v1161 = vrcp.pop %v1149
        %v1162 = vrcp.pop %v1152
        %v1163 = vrcp.pop %v1155
        %v1164 = vmul.f32 %v1117, %v1156
        %v1165 = vmul.f32 %v1119, %v1157
        %v1166 = vmul.f32 %v1121, %v1158
        %v1167 = vmul.f32 %v1123, %v1159
        %v1168 = vmul.f32 %v1125, %v1160
        %v1169 = vmul.f32 %v1127, %v1161
        %v1170 = vmul.f32 %v1129, %v1162
        %v1171 = vmul.f32 %v1131, %v1163
        %v1172 = vpack.c.bf16 %v1165, %v1164
        %v1173 = vpack.c.bf16 %v1167, %v1166
        %v1174 = vpack.c.bf16 %v1169, %v1168
        %v1175 = vpack.c.bf16 %v1171, %v1170
        %v1177 = vsel %vm1083, %v1172, 0
        %1179 = vmatprep.subr.bf16.mxu0 0
        %1180 = vmatpush1.bf16.msra.mxu0 %v850
        %1181 = vmatprep.subr.bf16.mxu0 0
        %1182 = vmatpush1.bf16.msra.mxu0 0
        %1183 = vmatprep.subr.bf16.mxu0 0
        %1184 = vmatpush1.bf16.msra.mxu0 0
        %1185 = vmatprep.subr.bf16.mxu0 0
        %1186 = vmatpush1.bf16.msra.mxu0 0
        %1187 = vmatprep.subr.bf16.mxu0 0
        %1188 = vmatpush1.bf16.msra.mxu0 0
        %1189 = vmatprep.subr.bf16.mxu0 0
        %1190 = vmatpush1.bf16.msra.mxu0 0
        %1191 = vmatprep.subr.bf16.mxu0 0
        %1192 = vmatpush1.bf16.msra.mxu0 0
        %1193 = vmatprep.subr.bf16.mxu0 0
        %1194 = vmatpush1.bf16.msra.mxu0 0
        %1195 = vmatprep.subr.bf16.mxu0 0
        %1196 = vmatpush1.bf16.msra.mxu0 0
        %1197 = vmatprep.subr.bf16.mxu0 0
        %1198 = vmatpush1.bf16.msra.mxu0 0
        %1199 = vmatprep.subr.bf16.mxu0 0
        %1200 = vmatpush1.bf16.msra.mxu0 0
        %1201 = vmatprep.subr.bf16.mxu0 0
        %1202 = vmatpush1.bf16.msra.mxu0 0
        %1203 = vmatprep.subr.bf16.mxu0 0
        %1204 = vmatpush1.bf16.msra.mxu0 0
        %1205 = vmatprep.subr.bf16.mxu0 0
        %1206 = vmatpush1.bf16.msra.mxu0 0
        %1207 = vmatprep.subr.bf16.mxu0 0
        %1208 = vmatpush1.bf16.msra.mxu0 0
        %1209 = vmatprep.subr.bf16.mxu0 0
        %1210 = vmatpush1.bf16.msra.mxu0 0
        %1211 = vmatprep.mubr.bf16.mxu0 0
        %1212 = vmatmul.mubr.bf16.gmra.mrb[0].mxu0 %v1177
        %v1213 = vpop.f32.mrb[0].mxu0
        %v1214 = vadd.f32 0.0, %v1213
        %v1215 = vpop.f32.mrb[0].mxu0
        %v1216 = vpop.f32.mrb[0].mxu0
        %v1217 = vadd.f32 0.0, %v1216
        %v1218 = vpop.f32.mrb[0].mxu0
        %1219 = vdwg.mxu0
        %v1221 = vsel %vm1083, %v1173, 0
        %1223 = vmatprep.subr.bf16.mxu0 0
        %1224 = vmatpush1.bf16.msra.mxu0 %v874
        %1225 = vmatprep.subr.bf16.mxu0 0
        %1226 = vmatpush1.bf16.msra.mxu0 0
        %1227 = vmatprep.subr.bf16.mxu0 0
        %1228 = vmatpush1.bf16.msra.mxu0 0
        %1229 = vmatprep.subr.bf16.mxu0 0
        %1230 = vmatpush1.bf16.msra.mxu0 0
        %1231 = vmatprep.subr.bf16.mxu0 0
        %1232 = vmatpush1.bf16.msra.mxu0 0
        %1233 = vmatprep.subr.bf16.mxu0 0
        %1234 = vmatpush1.bf16.msra.mxu0 0
        %1235 = vmatprep.subr.bf16.mxu0 0
        %1236 = vmatpush1.bf16.msra.mxu0 0
        %1237 = vmatprep.subr.bf16.mxu0 0
        %1238 = vmatpush1.bf16.msra.mxu0 0
        %1239 = vmatprep.subr.bf16.mxu0 0
        %1240 = vmatpush1.bf16.msra.mxu0 0
        %1241 = vmatprep.subr.bf16.mxu0 0
        %1242 = vmatpush1.bf16.msra.mxu0 0
        %1243 = vmatprep.subr.bf16.mxu0 0
        %1244 = vmatpush1.bf16.msra.mxu0 0
        %1245 = vmatprep.subr.bf16.mxu0 0
        %1246 = vmatpush1.bf16.msra.mxu0 0
        %1247 = vmatprep.subr.bf16.mxu0 0
        %1248 = vmatpush1.bf16.msra.mxu0 0
        %1249 = vmatprep.subr.bf16.mxu0 0
        %1250 = vmatpush1.bf16.msra.mxu0 0
        %1251 = vmatprep.subr.bf16.mxu0 0
        %1252 = vmatpush1.bf16.msra.mxu0 0
        %1253 = vmatprep.subr.bf16.mxu0 0
        %1254 = vmatpush1.bf16.msra.mxu0 0
        %1255 = vmatprep.mubr.bf16.mxu0 0
        %1256 = vmatmul.mubr.bf16.gmra.mrb[0].mxu0 %v1221
        %v1257 = vpop.f32.mrb[0].mxu0
        %v1258 = vadd.f32 0.0, %v1257
        %v1259 = vpop.f32.mrb[0].mxu0
        %v1260 = vpop.f32.mrb[0].mxu0
        %v1261 = vadd.f32 0.0, %v1260
        %v1262 = vpop.f32.mrb[0].mxu0
        %1263 = vdwg.mxu0
        %v1265 = vsel %vm1083, %v1174, 0
        %1267 = vmatprep.subr.bf16.mxu0 0
        %1268 = vmatpush1.bf16.msra.mxu0 %v877
        %1269 = vmatprep.subr.bf16.mxu0 0
        %1270 = vmatpush1.bf16.msra.mxu0 0
        %1271 = vmatprep.subr.bf16.mxu0 0
        %1272 = vmatpush1.bf16.msra.mxu0 0
        %1273 = vmatprep.subr.bf16.mxu0 0
        %1274 = vmatpush1.bf16.msra.mxu0 0
        %1275 = vmatprep.subr.bf16.mxu0 0
        %1276 = vmatpush1.bf16.msra.mxu0 0
        %1277 = vmatprep.subr.bf16.mxu0 0
        %1278 = vmatpush1.bf16.msra.mxu0 0
        %1279 = vmatprep.subr.bf16.mxu0 0
        %1280 = vmatpush1.bf16.msra.mxu0 0
        %1281 = vmatprep.subr.bf16.mxu0 0
        %1282 = vmatpush1.bf16.msra.mxu0 0
        %1283 = vmatprep.subr.bf16.mxu0 0
        %1284 = vmatpush1.bf16.msra.mxu0 0
        %1285 = vmatprep.subr.bf16.mxu0 0
        %1286 = vmatpush1.bf16.msra.mxu0 0
        %1287 = vmatprep.subr.bf16.mxu0 0
        %1288 = vmatpush1.bf16.msra.mxu0 0
        %1289 = vmatprep.subr.bf16.mxu0 0
        %1290 = vmatpush1.bf16.msra.mxu0 0
        %1291 = vmatprep.subr.bf16.mxu0 0
        %1292 = vmatpush1.bf16.msra.mxu0 0
        %1293 = vmatprep.subr.bf16.mxu0 0
        %1294 = vmatpush1.bf16.msra.mxu0 0
        %1295 = vmatprep.subr.bf16.mxu0 0
        %1296 = vmatpush1.bf16.msra.mxu0 0
        %1297 = vmatprep.subr.bf16.mxu0 0
        %1298 = vmatpush1.bf16.msra.mxu0 0
        %1299 = vmatprep.mubr.bf16.mxu0 0
        %1300 = vmatmul.mubr.bf16.gmra.mrb[0].mxu0 %v1265
        %v1301 = vpop.f32.mrb[0].mxu0
        %v1302 = vadd.f32 0.0, %v1301
        %v1303 = vpop.f32.mrb[0].mxu0
        %v1304 = vpop.f32.mrb[0].mxu0
        %v1305 = vadd.f32 0.0, %v1304
        %v1306 = vpop.f32.mrb[0].mxu0
        %1307 = vdwg.mxu0
        %v1309 = vsel %vm1083, %v1175, 0
        %1311 = vmatprep.subr.bf16.mxu0 0
        %1312 = vmatpush1.bf16.msra.mxu0 %v880
        %1313 = vmatprep.subr.bf16.mxu0 0
        %1314 = vmatpush1.bf16.msra.mxu0 0
        %1315 = vmatprep.subr.bf16.mxu0 0
        %1316 = vmatpush1.bf16.msra.mxu0 0
        %1317 = vmatprep.subr.bf16.mxu0 0
        %1318 = vmatpush1.bf16.msra.mxu0 0
        %1319 = vmatprep.subr.bf16.mxu0 0
        %1320 = vmatpush1.bf16.msra.mxu0 0
        %1321 = vmatprep.subr.bf16.mxu0 0
        %1322 = vmatpush1.bf16.msra.mxu0 0
        %1323 = vmatprep.subr.bf16.mxu0 0
        %1324 = vmatpush1.bf16.msra.mxu0 0
        %1325 = vmatprep.subr.bf16.mxu0 0
        %1326 = vmatpush1.bf16.msra.mxu0 0
        %1327 = vmatprep.subr.bf16.mxu0 0
        %1328 = vmatpush1.bf16.msra.mxu0 0
        %1329 = vmatprep.subr.bf16.mxu0 0
        %1330 = vmatpush1.bf16.msra.mxu0 0
        %1331 = vmatprep.subr.bf16.mxu0 0
        %1332 = vmatpush1.bf16.msra.mxu0 0
        %1333 = vmatprep.subr.bf16.mxu0 0
        %1334 = vmatpush1.bf16.msra.mxu0 0
        %1335 = vmatprep.subr.bf16.mxu0 0
        %1336 = vmatpush1.bf16.msra.mxu0 0
        %1337 = vmatprep.subr.bf16.mxu0 0
        %1338 = vmatpush1.bf16.msra.mxu0 0
        %1339 = vmatprep.subr.bf16.mxu0 0
        %1340 = vmatpush1.bf16.msra.mxu0 0
        %1341 = vmatprep.subr.bf16.mxu0 0
        %1342 = vmatpush1.bf16.msra.mxu0 0
        %1343 = vmatprep.mubr.bf16.mxu0 0
        %1344 = vmatmul.mubr.bf16.gmra.mrb[0].mxu0 %v1309
        %v1345 = vpop.f32.mrb[0].mxu0
        %v1346 = vadd.f32 0.0, %v1345
        %v1347 = vpop.f32.mrb[0].mxu0
        %v1348 = vpop.f32.mrb[0].mxu0
        %v1349 = vadd.f32 0.0, %v1348
        %v1350 = vpop.f32.mrb[0].mxu0
        %1351 = vdwg.mxu0
        %1354 = vrot.lane.b32.xlu0 %v1258, 32
        %v1355 = vpop.permute.xlu0 %1354
        %1356 = vrot.lane.b32.xlu0 %v1261, 32
        %v1357 = vpop.permute.xlu0 %1356
        %1362 = vrot.lane.b32.xlu0 %v1302, 64
        %v1363 = vpop.permute.xlu0 %1362
        %1364 = vrot.lane.b32.xlu0 %v1305, 64
        %v1365 = vpop.permute.xlu0 %1364
        %1370 = vrot.lane.b32.xlu0 %v1346, 96
        %v1371 = vpop.permute.xlu0 %1370
        %1372 = vrot.lane.b32.xlu0 %v1349, 96
        %v1373 = vpop.permute.xlu0 %1372
        %v1376 = vsel %vm882, %v1214, %v1355
        %v1377 = vsel %vm882, %v1217, %v1357
        %vm1378 = vcmask 523264
        %v1379 = vsel %vm1378, %v1376, %v1363
        %v1380 = vsel %vm1378, %v1377, %v1365
        %vm1381 = vcmask 785408
        %v1382 = vsel %vm1381, %v1379, %v1371
        %v1383 = vsel %vm1381, %v1380, %v1373
        %v1384 = vpack.c.bf16 %v1383, %v1382
        %v1385 = vld [vmem:[#allocation10] sm:$0xf]
        %v1386 = vld [vmem:[#allocation10 + $0x4] sm:$0xf]
        %v1387 = vld [vmem:[#allocation10 + $0x8] sm:$0xf]
        %v1388 = vld [vmem:[#allocation10 + $0xc] sm:$0xf]
        %v1389 = vld [vmem:[#allocation10 + $0x10] sm:$0xf]
        %v1390 = vld [vmem:[#allocation10 + $0x14] sm:$0xf]
        %v1391 = vld [vmem:[#allocation10 + $0x18] sm:$0xf]
        %v1392 = vld [vmem:[#allocation10 + $0x1c] sm:$0xf]
        %v1393 = vld [vmem:[#allocation10 + $0x20] sm:$0xf]
        %v1394 = vld [vmem:[#allocation10 + $0x24] sm:$0xf]
        %v1395 = vld [vmem:[#allocation10 + $0x28] sm:$0xf]
        %v1396 = vld [vmem:[#allocation10 + $0x2c] sm:$0xf]
        %v1397 = vld [vmem:[#allocation10 + $0x30] sm:$0xf]
        %v1398 = vld [vmem:[#allocation10 + $0x34] sm:$0xf]
        %v1399 = vld [vmem:[#allocation10 + $0x38] sm:$0xf]
        %v1400 = vld [vmem:[#allocation10 + $0x3c] sm:$0xf]
        %v1401 = vld [vmem:[%s6] sm:$0x1]
        %v1403 = vlaneseq
        %v1404 = vshrl.u32 %v1403, 7
        %v1405 = vsub.s32 0, %v1404
        %v1406 = vrot.slane %v1401, %v1405
        %v1424 = vunpack.c.l.b16 %v1385
        %v1425 = vunpack.c.l.b16 %v1386
        %v1426 = vunpack.c.l.b16 %v1387
        %v1427 = vunpack.c.l.b16 %v1388
        %v1428 = vunpack.c.l.b16 %v1389
        %v1429 = vunpack.c.l.b16 %v1390
        %v1430 = vunpack.c.l.b16 %v1391
        %v1431 = vunpack.c.l.b16 %v1392
        %v1432 = vunpack.c.l.b16 %v1393
        %v1433 = vunpack.c.l.b16 %v1394
        %v1434 = vunpack.c.l.b16 %v1395
        %v1435 = vunpack.c.l.b16 %v1396
        %v1436 = vunpack.c.l.b16 %v1397
        %v1437 = vunpack.c.l.b16 %v1398
        %v1438 = vunpack.c.l.b16 %v1399
        %v1439 = vunpack.c.l.b16 %v1400
        %v1440 = vpack.c.b16 %v1425, %v1424
        %v1441 = vpack.c.b16 %v1427, %v1426
        %v1442 = vpack.c.b16 %v1429, %v1428
        %v1443 = vpack.c.b16 %v1431, %v1430
        %v1444 = vpack.c.b16 %v1433, %v1432
        %v1445 = vpack.c.b16 %v1435, %v1434
        %v1446 = vpack.c.b16 %v1437, %v1436
        %v1447 = vpack.c.b16 %v1439, %v1438
        %1456 = vmatprep.subr.bf16.mxu0 0
        %1457 = vmatpush1.bf16.msra.mxu0 %v1440
        %1458 = vmatprep.subr.bf16.mxu0 0
        %1459 = vmatpush1.bf16.msra.mxu0 %v1441
        %1460 = vmatprep.subr.bf16.mxu0 0
        %1461 = vmatpush1.bf16.msra.mxu0 %v1442
        %1462 = vmatprep.subr.bf16.mxu0 0
        %1463 = vmatpush1.bf16.msra.mxu0 %v1443
        %1464 = vmatprep.subr.bf16.mxu0 0
        %1465 = vmatpush1.bf16.msra.mxu0 %v1444
        %1466 = vmatprep.subr.bf16.mxu0 0
        %1467 = vmatpush1.bf16.msra.mxu0 %v1445
        %1468 = vmatprep.subr.bf16.mxu0 0
        %1469 = vmatpush1.bf16.msra.mxu0 %v1446
        %1470 = vmatprep.subr.bf16.mxu0 0
        %1471 = vmatpush1.bf16.msra.mxu0 %v1447
        %1472 = vmatprep.subr.bf16.mxu0 0
        %1473 = vmatpush1.bf16.msra.mxu0 0
        %1474 = vmatprep.subr.bf16.mxu0 0
        %1475 = vmatpush1.bf16.msra.mxu0 0
        %1476 = vmatprep.subr.bf16.mxu0 0
        %1477 = vmatpush1.bf16.msra.mxu0 0
        %1478 = vmatprep.subr.bf16.mxu0 0
        %1479 = vmatpush1.bf16.msra.mxu0 0
        %1480 = vmatprep.subr.bf16.mxu0 0
        %1481 = vmatpush1.bf16.msra.mxu0 0
        %1482 = vmatprep.subr.bf16.mxu0 0
        %1483 = vmatpush1.bf16.msra.mxu0 0
        %1484 = vmatprep.subr.bf16.mxu0 0
        %1485 = vmatpush1.bf16.msra.mxu0 0
        %1486 = vmatprep.subr.bf16.mxu0 0
        %1487 = vmatpush1.bf16.msra.mxu0 0
        %1488 = vmatprep.mubr.bf16.mxu0 0
        %1489 = vmatmul.mubr.bf16.gmra.mrb[0].mxu0 %v1384
        %v1490 = vpop.f32.mrb[0].mxu0
        %v1491 = vadd.f32 %v1406, %v1490
        %v1492 = vpop.f32.mrb[0].mxu0
        %v1493 = vpop.f32.mrb[0].mxu0
        %v1494 = vadd.f32 %v1406, %v1493
        %v1495 = vpop.f32.mrb[0].mxu0
        %1496 = vdwg.mxu0
        %v1497 = vadd.f32 %v543, %v1491
        %v1498 = vadd.f32 %v544, %v1494
        %v1499 = vld [vmem:[%s7] sm:$0x1]
        %v1500 = vld [vmem:[%s8] sm:$0x1]
        %1501 = vadd.xlane.f32.xlu0 %v1497
        %v1502 = vpop.xlane.xlu0 %1501
        %1503 = vadd.xlane.f32.xlu0 %v1498
        %v1504 = vpop.xlane.xlu0 %1503
        %v1505 = vmul.f32 %v1502, %v551
        %v1506 = vmul.f32 %v1504, %v551
        %v1507 = vsub.f32 %v1497, %v1505
        %v1508 = vsub.f32 %v1498, %v1506
        %v1509 = vmul.f32 %v1507, %v1507
        %v1510 = vmul.f32 %v1508, %v1508
        %1511 = vadd.xlane.f32.xlu0 %v1509
        %v1512 = vpop.xlane.xlu0 %1511
        %1513 = vadd.xlane.f32.xlu0 %v1510
        %v1514 = vpop.xlane.xlu0 %1513
        %v1515 = vmul.f32 %v1512, %v551
        %v1516 = vmul.f32 %v1514, %v551
        %v1517 = vadd.f32 %v1515, 1e-05
        %v1518 = vadd.f32 %v1516, 1e-05
        %v1519 = vrsqrt.pop %v1517
        %v1520 = vrsqrt.pop %v1518
        %v1521 = vmul.f32 %v1507, %v1519
        %v1522 = vmul.f32 %v1508, %v1520
        %v1524 = vlaneseq
        %v1525 = vshrl.u32 %v1524, 7
        %v1526 = vsub.s32 0, %v1525
        %v1527 = vrot.slane %v1499, %v1526
        %v1529 = vmul.f32 %v1521, %v1527
        %v1530 = vmul.f32 %v1522, %v1527
        %v1532 = vlaneseq
        %v1533 = vshrl.u32 %v1532, 7
        %v1534 = vsub.s32 0, %v1533
        %v1535 = vrot.slane %v1500, %v1534
        %v1537 = vadd.f32 %v1529, %v1535
        %v1538 = vadd.f32 %v1530, %v1535
        %v1539 = vpack.c.bf16 %v1538, %v1537
        %v1540 = vld [vmem:[#allocation11] sm:$0xff]
        %v1541 = vld [vmem:[#allocation11 + $0x8] sm:$0xff]
        %v1542 = vld [vmem:[#allocation11 + $0x10] sm:$0xff]
        %v1543 = vld [vmem:[#allocation11 + $0x18] sm:$0xff]
        %v1544 = vld [vmem:[#allocation11 + $0x20] sm:$0xff]
        %v1545 = vld [vmem:[#allocation11 + $0x28] sm:$0xff]
        %v1546 = vld [vmem:[#allocation11 + $0x30] sm:$0xff]
        %v1547 = vld [vmem:[#allocation11 + $0x38] sm:$0xff]
        %v1548 = vld [vmem:[#allocation11 + $0x40] sm:$0xff]
        %v1549 = vld [vmem:[#allocation11 + $0x48] sm:$0xff]
        %v1550 = vld [vmem:[#allocation11 + $0x50] sm:$0xff]
        %v1551 = vld [vmem:[#allocation11 + $0x58] sm:$0xff]
        %v1552 = vld [vmem:[#allocation11 + $0x60] sm:$0xff]
        %v1553 = vld [vmem:[#allocation11 + $0x68] sm:$0xff]
        %v1554 = vld [vmem:[#allocation11 + $0x70] sm:$0xff]
        %v1555 = vld [vmem:[#allocation11 + $0x78] sm:$0xff]
        %v1556 = vld [vmem:[#allocation11 + $0x80] sm:$0xff]
        %v1557 = vld [vmem:[#allocation11 + $0x88] sm:$0xff]
        %v1558 = vld [vmem:[#allocation11 + $0x90] sm:$0xff]
        %v1559 = vld [vmem:[#allocation11 + $0x98] sm:$0xff]
        %v1560 = vld [vmem:[#allocation11 + $0xa0] sm:$0xff]
        %v1561 = vld [vmem:[#allocation11 + $0xa8] sm:$0xff]
        %v1562 = vld [vmem:[#allocation11 + $0xb0] sm:$0xff]
        %v1563 = vld [vmem:[#allocation11 + $0xb8] sm:$0xff]
        %v1564 = vld [vmem:[#allocation11 + $0xc0] sm:$0xff]
        %v1565 = vld [vmem:[#allocation11 + $0xc8] sm:$0xff]
        %v1566 = vld [vmem:[#allocation11 + $0xd0] sm:$0xff]
        %v1567 = vld [vmem:[#allocation11 + $0xd8] sm:$0xff]
        %v1568 = vld [vmem:[#allocation11 + $0xe0] sm:$0xff]
        %v1569 = vld [vmem:[#allocation11 + $0xe8] sm:$0xff]
        %v1570 = vld [vmem:[#allocation11 + $0xf0] sm:$0xff]
        %v1571 = vld [vmem:[#allocation11 + $0xf8] sm:$0xff]
        %v1572 = vld [vmem:[%s10] sm:$0xf]
        %v1574 = vlaneseq
        %v1575 = vshrl.u32 %v1574, 7
        %v1576 = vsub.s32 0, %v1575
        %v1577 = vrot.slane %v1572, %v1576
        %v1578 = vlaneseq
        %v1579 = vshrl.u32 %v1578, 7
        %v1580 = vsub.s32 1, %v1579
        %v1581 = vrot.slane %v1572, %v1580
        %v1582 = vlaneseq
        %v1583 = vshrl.u32 %v1582, 7
        %v1584 = vsub.s32 2, %v1583
        %v1585 = vrot.slane %v1572, %v1584
        %v1586 = vlaneseq
        %v1587 = vshrl.u32 %v1586, 7
        %v1588 = vsub.s32 3, %v1587
        %v1589 = vrot.slane %v1572, %v1588
        %v1626 = vunpack.c.l.b16 %v1540
        %v1627 = vunpack.c.h.b16 %v1540
        %v1628 = vunpack.c.l.b16 %v1541
        %v1629 = vunpack.c.h.b16 %v1541
        %v1630 = vunpack.c.l.b16 %v1542
        %v1631 = vunpack.c.h.b16 %v1542
        %v1632 = vunpack.c.l.b16 %v1543
        %v1633 = vunpack.c.h.b16 %v1543
        %v1634 = vunpack.c.l.b16 %v1544
        %v1635 = vunpack.c.h.b16 %v1544
        %v1636 = vunpack.c.l.b16 %v1545
        %v1637 = vunpack.c.h.b16 %v1545
        %v1638 = vunpack.c.l.b16 %v1546
        %v1639 = vunpack.c.h.b16 %v1546
        %v1640 = vunpack.c.l.b16 %v1547
        %v1641 = vunpack.c.h.b16 %v1547
        %v1642 = vunpack.c.l.b16 %v1548
        %v1643 = vunpack.c.h.b16 %v1548
        %v1644 = vunpack.c.l.b16 %v1549
        %v1645 = vunpack.c.h.b16 %v1549
        %v1646 = vunpack.c.l.b16 %v1550
        %v1647 = vunpack.c.h.b16 %v1550
        %v1648 = vunpack.c.l.b16 %v1551
        %v1649 = vunpack.c.h.b16 %v1551
        %v1650 = vunpack.c.l.b16 %v1552
        %v1651 = vunpack.c.h.b16 %v1552
        %v1652 = vunpack.c.l.b16 %v1553
        %v1653 = vunpack.c.h.b16 %v1553
        %v1654 = vunpack.c.l.b16 %v1554
        %v1655 = vunpack.c.h.b16 %v1554
        %v1656 = vunpack.c.l.b16 %v1555
        %v1657 = vunpack.c.h.b16 %v1555
        %v1658 = vunpack.c.l.b16 %v1556
        %v1659 = vunpack.c.h.b16 %v1556
        %v1660 = vunpack.c.l.b16 %v1557
        %v1661 = vunpack.c.h.b16 %v1557
        %v1662 = vunpack.c.l.b16 %v1558
        %v1663 = vunpack.c.h.b16 %v1558
        %v1664 = vunpack.c.l.b16 %v1559
        %v1665 = vunpack.c.h.b16 %v1559
        %v1666 = vunpack.c.l.b16 %v1560
        %v1667 = vunpack.c.h.b16 %v1560
        %v1668 = vunpack.c.l.b16 %v1561
        %v1669 = vunpack.c.h.b16 %v1561
        %v1670 = vunpack.c.l.b16 %v1562
        %v1671 = vunpack.c.h.b16 %v1562
        %v1672 = vunpack.c.l.b16 %v1563
        %v1673 = vunpack.c.h.b16 %v1563
        %v1674 = vunpack.c.l.b16 %v1564
        %v1675 = vunpack.c.h.b16 %v1564
        %v1676 = vunpack.c.l.b16 %v1565
        %v1677 = vunpack.c.h.b16 %v1565
        %v1678 = vunpack.c.l.b16 %v1566
        %v1679 = vunpack.c.h.b16 %v1566
        %v1680 = vunpack.c.l.b16 %v1567
        %v1681 = vunpack.c.h.b16 %v1567
        %v1682 = vunpack.c.l.b16 %v1568
        %v1683 = vunpack.c.h.b16 %v1568
        %v1684 = vunpack.c.l.b16 %v1569
        %v1685 = vunpack.c.h.b16 %v1569
        %v1686 = vunpack.c.l.b16 %v1570
        %v1687 = vunpack.c.h.b16 %v1570
        %v1688 = vunpack.c.l.b16 %v1571
        %v1689 = vunpack.c.h.b16 %v1571
        %v1690 = vpack.c.b16 %v1630, %v1626
        %v1691 = vpack.c.b16 %v1631, %v1627
        %v1692 = vpack.c.b16 %v1632, %v1628
        %v1693 = vpack.c.b16 %v1633, %v1629
        %v1694 = vpack.c.b16 %v1638, %v1634
        %v1695 = vpack.c.b16 %v1639, %v1635
        %v1696 = vpack.c.b16 %v1640, %v1636
        %v1697 = vpack.c.b16 %v1641, %v1637
        %v1698 = vpack.c.b16 %v1646, %v1642
        %v1699 = vpack.c.b16 %v1647, %v1643
        %v1700 = vpack.c.b16 %v1648, %v1644
        %v1701 = vpack.c.b16 %v1649, %v1645
        %v1702 = vpack.c.b16 %v1654, %v1650
        %v1703 = vpack.c.b16 %v1655, %v1651
        %v1704 = vpack.c.b16 %v1656, %v1652
        %v1705 = vpack.c.b16 %v1657, %v1653
        %v1706 = vpack.c.b16 %v1662, %v1658
        %v1707 = vpack.c.b16 %v1663, %v1659
        %v1708 = vpack.c.b16 %v1664, %v1660
        %v1709 = vpack.c.b16 %v1665, %v1661
        %v1710 = vpack.c.b16 %v1670, %v1666
        %v1711 = vpack.c.b16 %v1671, %v1667
        %v1712 = vpack.c.b16 %v1672, %v1668
        %v1713 = vpack.c.b16 %v1673, %v1669
        %v1714 = vpack.c.b16 %v1678, %v1674
        %v1715 = vpack.c.b16 %v1679, %v1675
        %v1716 = vpack.c.b16 %v1680, %v1676
        %v1717 = vpack.c.b16 %v1681, %v1677
        %v1718 = vpack.c.b16 %v1686, %v1682
        %v1719 = vpack.c.b16 %v1687, %v1683
        %v1720 = vpack.c.b16 %v1688, %v1684
        %v1721 = vpack.c.b16 %v1689, %v1685
        %1754 = vmatprep.subr.bf16.mxu0 %v1691
        %1755 = vmatpush1.bf16.msra.mxu0 %v1690
        %1756 = vmatprep.subr.bf16.mxu0 %v1695
        %1757 = vmatpush1.bf16.msra.mxu0 %v1694
        %1758 = vmatprep.subr.bf16.mxu0 %v1699
        %1759 = vmatpush1.bf16.msra.mxu0 %v1698
        %1760 = vmatprep.subr.bf16.mxu0 %v1703
        %1761 = vmatpush1.bf16.msra.mxu0 %v1702
        %1762 = vmatprep.subr.bf16.mxu0 %v1707
        %1763 = vmatpush1.bf16.msra.mxu0 %v1706
        %1764 = vmatprep.subr.bf16.mxu0 %v1711
        %1765 = vmatpush1.bf16.msra.mxu0 %v1710
        %1766 = vmatprep.subr.bf16.mxu0 %v1715
        %1767 = vmatpush1.bf16.msra.mxu0 %v1714
        %1768 = vmatprep.subr.bf16.mxu0 %v1719
        %1769 = vmatpush1.bf16.msra.mxu0 %v1718
        %1770 = vmatprep.subr.bf16.mxu0 0
        %1771 = vmatpush1.bf16.msra.mxu0 0
        %1772 = vmatprep.subr.bf16.mxu0 0
        %1773 = vmatpush1.bf16.msra.mxu0 0
        %1774 = vmatprep.subr.bf16.mxu0 0
        %1775 = vmatpush1.bf16.msra.mxu0 0
        %1776 = vmatprep.subr.bf16.mxu0 0
        %1777 = vmatpush1.bf16.msra.mxu0 0
        %1778 = vmatprep.subr.bf16.mxu0 0
        %1779 = vmatpush1.bf16.msra.mxu0 0
        %1780 = vmatprep.subr.bf16.mxu0 0
        %1781 = vmatpush1.bf16.msra.mxu0 0
        %1782 = vmatprep.subr.bf16.mxu0 0
        %1783 = vmatpush1.bf16.msra.mxu0 0
        %1784 = vmatprep.subr.bf16.mxu0 0
        %1785 = vmatpush1.bf16.msra.mxu0 0
        %1786 = vmatprep.mubr.bf16.mxu0 0
        %1787 = vmatmul.mubr.bf16.gmra.mrb[0].mxu0 %v1539
        %v1788 = vpop.f32.mrb[0].mxu0
        %v1789 = vadd.f32 %v1577, %v1788
        %v1790 = vpop.f32.mrb[0].mxu0
        %v1791 = vadd.f32 %v1581, %v1790
        %v1792 = vpop.f32.mrb[0].mxu0
        %v1793 = vadd.f32 %v1577, %v1792
        %v1794 = vpop.f32.mrb[0].mxu0
        %v1795 = vadd.f32 %v1581, %v1794
        %1796 = vdwg.mxu0
        %1797 = vmatprep.subr.bf16.mxu0 %v1693
        %1798 = vmatpush1.bf16.msra.mxu0 %v1692
        %1799 = vmatprep.subr.bf16.mxu0 %v1697
        %1800 = vmatpush1.bf16.msra.mxu0 %v1696
        %1801 = vmatprep.subr.bf16.mxu0 %v1701
        %1802 = vmatpush1.bf16.msra.mxu0 %v1700
        %1803 = vmatprep.subr.bf16.mxu0 %v1705
        %1804 = vmatpush1.bf16.msra.mxu0 %v1704
        %1805 = vmatprep.subr.bf16.mxu0 %v1709
        %1806 = vmatpush1.bf16.msra.mxu0 %v1708
        %1807 = vmatprep.subr.bf16.mxu0 %v1713
        %1808 = vmatpush1.bf16.msra.mxu0 %v1712
        %1809 = vmatprep.subr.bf16.mxu0 %v1717
        %1810 = vmatpush1.bf16.msra.mxu0 %v1716
        %1811 = vmatprep.subr.bf16.mxu0 %v1721
        %1812 = vmatpush1.bf16.msra.mxu0 %v1720
        %1813 = vmatprep.subr.bf16.mxu0 0
        %1814 = vmatpush1.bf16.msra.mxu0 0
        %1815 = vmatprep.subr.bf16.mxu0 0
        %1816 = vmatpush1.bf16.msra.mxu0 0
        %1817 = vmatprep.subr.bf16.mxu0 0
        %1818 = vmatpush1.bf16.msra.mxu0 0
        %1819 = vmatprep.subr.bf16.mxu0 0
        %1820 = vmatpush1.bf16.msra.mxu0 0
        %1821 = vmatprep.subr.bf16.mxu0 0
        %1822 = vmatpush1.bf16.msra.mxu0 0
        %1823 = vmatprep.subr.bf16.mxu0 0
        %1824 = vmatpush1.bf16.msra.mxu0 0
        %1825 = vmatprep.subr.bf16.mxu0 0
        %1826 = vmatpush1.bf16.msra.mxu0 0
        %1827 = vmatprep.subr.bf16.mxu0 0
        %1828 = vmatpush1.bf16.msra.mxu0 0
        %1829 = vmatprep.mubr.bf16.mxu0 0
        %1830 = vmatmul.mubr.bf16.gmra.mrb[0].mxu0 %v1539
        %v1831 = vpop.f32.mrb[0].mxu0
        %v1832 = vadd.f32 %v1585, %v1831
        %v1833 = vpop.f32.mrb[0].mxu0
        %v1834 = vadd.f32 %v1589, %v1833
        %v1835 = vpop.f32.mrb[0].mxu0
        %v1836 = vadd.f32 %v1585, %v1835
        %v1837 = vpop.f32.mrb[0].mxu0
        %v1838 = vadd.f32 %v1589, %v1837
        %1839 = vdwg.mxu0
        %v1840 = vmul.f32 %v1789, 0.5
        %v1841 = vmul.f32 %v1791, 0.5
        %v1842 = vmul.f32 %v1832, 0.5
        %v1843 = vmul.f32 %v1834, 0.5
        %v1844 = vmul.f32 %v1793, 0.5
        %v1845 = vmul.f32 %v1795, 0.5
        %v1846 = vmul.f32 %v1836, 0.5
        %v1847 = vmul.f32 %v1838, 0.5
        %v1848 = vmul.f32 %v1789, 0.70710677
        %v1849 = vmul.f32 %v1791, 0.70710677
        %v1850 = vmul.f32 %v1832, 0.70710677
        %v1851 = vmul.f32 %v1834, 0.70710677
        %v1852 = vmul.f32 %v1793, 0.70710677
        %v1853 = vmul.f32 %v1795, 0.70710677
        %v1854 = vmul.f32 %v1836, 0.70710677
        %v1855 = vmul.f32 %v1838, 0.70710677
        %v1856 = verf.f32.pop %v1848
        %v1857 = verf.f32.pop %v1849
        %v1858 = verf.f32.pop %v1850
        %v1859 = verf.f32.pop %v1851
        %v1860 = verf.f32.pop %v1852
        %v1861 = verf.f32.pop %v1853
        %v1862 = verf.f32.pop %v1854
        %v1863 = verf.f32.pop %v1855
        %v1864 = vadd.f32 %v1856, 1.0
        %v1865 = vadd.f32 %v1857, 1.0
        %v1866 = vadd.f32 %v1858, 1.0
        %v1867 = vadd.f32 %v1859, 1.0
        %v1868 = vadd.f32 %v1860, 1.0
        %v1869 = vadd.f32 %v1861, 1.0
        %v1870 = vadd.f32 %v1862, 1.0
        %v1871 = vadd.f32 %v1863, 1.0
        %v1872 = vmul.f32 %v1840, %v1864
        %v1873 = vmul.f32 %v1841, %v1865
        %v1874 = vmul.f32 %v1842, %v1866
        %v1875 = vmul.f32 %v1843, %v1867
        %v1876 = vmul.f32 %v1844, %v1868
        %v1877 = vmul.f32 %v1845, %v1869
        %v1878 = vmul.f32 %v1846, %v1870
        %v1879 = vmul.f32 %v1847, %v1871
        %v1880 = vpack.c.bf16 %v1876, %v1872
        %v1881 = vpack.c.bf16 %v1877, %v1873
        %v1882 = vpack.c.bf16 %v1878, %v1874
        %v1883 = vpack.c.bf16 %v1879, %v1875
        %v1884 = vld [vmem:[#allocation13] sm:$0xf]
        %v1885 = vld [vmem:[#allocation13 + $0x4] sm:$0xf]
        %v1886 = vld [vmem:[#allocation13 + $0x8] sm:$0xf]
        %v1887 = vld [vmem:[#allocation13 + $0xc] sm:$0xf]
        %v1888 = vld [vmem:[#allocation13 + $0x10] sm:$0xf]
        %v1889 = vld [vmem:[#allocation13 + $0x14] sm:$0xf]
        %v1890 = vld [vmem:[#allocation13 + $0x18] sm:$0xf]
        %v1891 = vld [vmem:[#allocation13 + $0x1c] sm:$0xf]
        %v1892 = vld [vmem:[#allocation13 + $0x20] sm:$0xf]
        %v1893 = vld [vmem:[#allocation13 + $0x24] sm:$0xf]
        %v1894 = vld [vmem:[#allocation13 + $0x28] sm:$0xf]
        %v1895 = vld [vmem:[#allocation13 + $0x2c] sm:$0xf]
        %v1896 = vld [vmem:[#allocation13 + $0x30] sm:$0xf]
        %v1897 = vld [vmem:[#allocation13 + $0x34] sm:$0xf]
        %v1898 = vld [vmem:[#allocation13 + $0x38] sm:$0xf]
        %v1899 = vld [vmem:[#allocation13 + $0x3c] sm:$0xf]
        %v1900 = vld [vmem:[#allocation13 + $0x40] sm:$0xf]
        %v1901 = vld [vmem:[#allocation13 + $0x44] sm:$0xf]
        %v1902 = vld [vmem:[#allocation13 + $0x48] sm:$0xf]
        %v1903 = vld [vmem:[#allocation13 + $0x4c] sm:$0xf]
        %v1904 = vld [vmem:[#allocation13 + $0x50] sm:$0xf]
        %v1905 = vld [vmem:[#allocation13 + $0x54] sm:$0xf]
        %v1906 = vld [vmem:[#allocation13 + $0x58] sm:$0xf]
        %v1907 = vld [vmem:[#allocation13 + $0x5c] sm:$0xf]
        %v1908 = vld [vmem:[#allocation13 + $0x60] sm:$0xf]
        %v1909 = vld [vmem:[#allocation13 + $0x64] sm:$0xf]
        %v1910 = vld [vmem:[#allocation13 + $0x68] sm:$0xf]
        %v1911 = vld [vmem:[#allocation13 + $0x6c] sm:$0xf]
        %v1912 = vld [vmem:[#allocation13 + $0x70] sm:$0xf]
        %v1913 = vld [vmem:[#allocation13 + $0x74] sm:$0xf]
        %v1914 = vld [vmem:[#allocation13 + $0x78] sm:$0xf]
        %v1915 = vld [vmem:[#allocation13 + $0x7c] sm:$0xf]
        %v1916 = vld [vmem:[#allocation13 + $0x80] sm:$0xf]
        %v1917 = vld [vmem:[#allocation13 + $0x84] sm:$0xf]
        %v1918 = vld [vmem:[#allocation13 + $0x88] sm:$0xf]
        %v1919 = vld [vmem:[#allocation13 + $0x8c] sm:$0xf]
        %v1920 = vld [vmem:[#allocation13 + $0x90] sm:$0xf]
        %v1921 = vld [vmem:[#allocation13 + $0x94] sm:$0xf]
        %v1922 = vld [vmem:[#allocation13 + $0x98] sm:$0xf]
        %v1923 = vld [vmem:[#allocation13 + $0x9c] sm:$0xf]
        %v1924 = vld [vmem:[#allocation13 + $0xa0] sm:$0xf]
        %v1925 = vld [vmem:[#allocation13 + $0xa4] sm:$0xf]
        %v1926 = vld [vmem:[#allocation13 + $0xa8] sm:$0xf]
        %v1927 = vld [vmem:[#allocation13 + $0xac] sm:$0xf]
        %v1928 = vld [vmem:[#allocation13 + $0xb0] sm:$0xf]
        %v1929 = vld [vmem:[#allocation13 + $0xb4] sm:$0xf]
        %v1930 = vld [vmem:[#allocation13 + $0xb8] sm:$0xf]
        %v1931 = vld [vmem:[#allocation13 + $0xbc] sm:$0xf]
        %v1932 = vld [vmem:[#allocation13 + $0xc0] sm:$0xf]
        %v1933 = vld [vmem:[#allocation13 + $0xc4] sm:$0xf]
        %v1934 = vld [vmem:[#allocation13 + $0xc8] sm:$0xf]
        %v1935 = vld [vmem:[#allocation13 + $0xcc] sm:$0xf]
        %v1936 = vld [vmem:[#allocation13 + $0xd0] sm:$0xf]
        %v1937 = vld [vmem:[#allocation13 + $0xd4] sm:$0xf]
        %v1938 = vld [vmem:[#allocation13 + $0xd8] sm:$0xf]
        %v1939 = vld [vmem:[#allocation13 + $0xdc] sm:$0xf]
        %v1940 = vld [vmem:[#allocation13 + $0xe0] sm:$0xf]
        %v1941 = vld [vmem:[#allocation13 + $0xe4] sm:$0xf]
        %v1942 = vld [vmem:[#allocation13 + $0xe8] sm:$0xf]
        %v1943 = vld [vmem:[#allocation13 + $0xec] sm:$0xf]
        %v1944 = vld [vmem:[#allocation13 + $0xf0] sm:$0xf]
        %v1945 = vld [vmem:[#allocation13 + $0xf4] sm:$0xf]
        %v1946 = vld [vmem:[#allocation13 + $0xf8] sm:$0xf]
        %v1947 = vld [vmem:[#allocation13 + $0xfc] sm:$0xf]
        %v1948 = vld [vmem:[%s12] sm:$0x1]
        %v1950 = vlaneseq
        %v1951 = vshrl.u32 %v1950, 7
        %v1952 = vsub.s32 0, %v1951
        %v1953 = vrot.slane %v1948, %v1952
        %v2019 = vunpack.c.l.b16 %v1884
        %v2020 = vunpack.c.l.b16 %v1885
        %v2021 = vunpack.c.l.b16 %v1886
        %v2022 = vunpack.c.l.b16 %v1887
        %v2023 = vunpack.c.l.b16 %v1888
        %v2024 = vunpack.c.l.b16 %v1889
        %v2025 = vunpack.c.l.b16 %v1890
        %v2026 = vunpack.c.l.b16 %v1891
        %v2027 = vunpack.c.l.b16 %v1892
        %v2028 = vunpack.c.l.b16 %v1893
        %v2029 = vunpack.c.l.b16 %v1894
        %v2030 = vunpack.c.l.b16 %v1895
        %v2031 = vunpack.c.l.b16 %v1896
        %v2032 = vunpack.c.l.b16 %v1897
        %v2033 = vunpack.c.l.b16 %v1898
        %v2034 = vunpack.c.l.b16 %v1899
        %v2035 = vunpack.c.l.b16 %v1900
        %v2036 = vunpack.c.l.b16 %v1901
        %v2037 = vunpack.c.l.b16 %v1902
        %v2038 = vunpack.c.l.b16 %v1903
        %v2039 = vunpack.c.l.b16 %v1904
        %v2040 = vunpack.c.l.b16 %v1905
        %v2041 = vunpack.c.l.b16 %v1906
        %v2042 = vunpack.c.l.b16 %v1907
        %v2043 = vunpack.c.l.b16 %v1908
        %v2044 = vunpack.c.l.b16 %v1909
        %v2045 = vunpack.c.l.b16 %v1910
        %v2046 = vunpack.c.l.b16 %v1911
        %v2047 = vunpack.c.l.b16 %v1912
        %v2048 = vunpack.c.l.b16 %v1913
        %v2049 = vunpack.c.l.b16 %v1914
        %v2050 = vunpack.c.l.b16 %v1915
        %v2051 = vunpack.c.l.b16 %v1916
        %v2052 = vunpack.c.l.b16 %v1917
        %v2053 = vunpack.c.l.b16 %v1918
        %v2054 = vunpack.c.l.b16 %v1919
        %v2055 = vunpack.c.l.b16 %v1920
        %v2056 = vunpack.c.l.b16 %v1921
        %v2057 = vunpack.c.l.b16 %v1922
        %v2058 = vunpack.c.l.b16 %v1923
        %v2059 = vunpack.c.l.b16 %v1924
        %v2060 = vunpack.c.l.b16 %v1925
        %v2061 = vunpack.c.l.b16 %v1926
        %v2062 = vunpack.c.l.b16 %v1927
        %v2063 = vunpack.c.l.b16 %v1928
        %v2064 = vunpack.c.l.b16 %v1929
        %v2065 = vunpack.c.l.b16 %v1930
        %v2066 = vunpack.c.l.b16 %v1931
        %v2067 = vunpack.c.l.b16 %v1932
        %v2068 = vunpack.c.l.b16 %v1933
        %v2069 = vunpack.c.l.b16 %v1934
        %v2070 = vunpack.c.l.b16 %v1935
        %v2071 = vunpack.c.l.b16 %v1936
        %v2072 = vunpack.c.l.b16 %v1937
        %v2073 = vunpack.c.l.b16 %v1938
        %v2074 = vunpack.c.l.b16 %v1939
        %v2075 = vunpack.c.l.b16 %v1940
        %v2076 = vunpack.c.l.b16 %v1941
        %v2077 = vunpack.c.l.b16 %v1942
        %v2078 = vunpack.c.l.b16 %v1943
        %v2079 = vunpack.c.l.b16 %v1944
        %v2080 = vunpack.c.l.b16 %v1945
        %v2081 = vunpack.c.l.b16 %v1946
        %v2082 = vunpack.c.l.b16 %v1947
        %v2083 = vpack.c.b16 %v2020, %v2019
        %v2084 = vpack.c.b16 %v2022, %v2021
        %v2085 = vpack.c.b16 %v2024, %v2023
        %v2086 = vpack.c.b16 %v2026, %v2025
        %v2087 = vpack.c.b16 %v2028, %v2027
        %v2088 = vpack.c.b16 %v2030, %v2029
        %v2089 = vpack.c.b16 %v2032, %v2031
        %v2090 = vpack.c.b16 %v2034, %v2033
        %v2091 = vpack.c.b16 %v2036, %v2035
        %v2092 = vpack.c.b16 %v2038, %v2037
        %v2093 = vpack.c.b16 %v2040, %v2039
        %v2094 = vpack.c.b16 %v2042, %v2041
        %v2095 = vpack.c.b16 %v2044, %v2043
        %v2096 = vpack.c.b16 %v2046, %v2045
        %v2097 = vpack.c.b16 %v2048, %v2047
        %v2098 = vpack.c.b16 %v2050, %v2049
        %v2099 = vpack.c.b16 %v2052, %v2051
        %v2100 = vpack.c.b16 %v2054, %v2053
        %v2101 = vpack.c.b16 %v2056, %v2055
        %v2102 = vpack.c.b16 %v2058, %v2057
        %v2103 = vpack.c.b16 %v2060, %v2059
        %v2104 = vpack.c.b16 %v2062, %v2061
        %v2105 = vpack.c.b16 %v2064, %v2063
        %v2106 = vpack.c.b16 %v2066, %v2065
        %v2107 = vpack.c.b16 %v2068, %v2067
        %v2108 = vpack.c.b16 %v2070, %v2069
        %v2109 = vpack.c.b16 %v2072, %v2071
        %v2110 = vpack.c.b16 %v2074, %v2073
        %v2111 = vpack.c.b16 %v2076, %v2075
        %v2112 = vpack.c.b16 %v2078, %v2077
        %v2113 = vpack.c.b16 %v2080, %v2079
        %v2114 = vpack.c.b16 %v2082, %v2081
        %2147 = vmatprep.subr.bf16.mxu0 0
        %2148 = vmatpush1.bf16.msra.mxu0 %v2083
        %2149 = vmatprep.subr.bf16.mxu0 0
        %2150 = vmatpush1.bf16.msra.mxu0 %v2084
        %2151 = vmatprep.subr.bf16.mxu0 0
        %2152 = vmatpush1.bf16.msra.mxu0 %v2085
        %2153 = vmatprep.subr.bf16.mxu0 0
        %2154 = vmatpush1.bf16.msra.mxu0 %v2086
        %2155 = vmatprep.subr.bf16.mxu0 0
        %2156 = vmatpush1.bf16.msra.mxu0 %v2087
        %2157 = vmatprep.subr.bf16.mxu0 0
        %2158 = vmatpush1.bf16.msra.mxu0 %v2088
        %2159 = vmatprep.subr.bf16.mxu0 0
        %2160 = vmatpush1.bf16.msra.mxu0 %v2089
        %2161 = vmatprep.subr.bf16.mxu0 0
        %2162 = vmatpush1.bf16.msra.mxu0 %v2090
        %2163 = vmatprep.subr.bf16.mxu0 0
        %2164 = vmatpush1.bf16.msra.mxu0 %v2091
        %2165 = vmatprep.subr.bf16.mxu0 0
        %2166 = vmatpush1.bf16.msra.mxu0 %v2092
        %2167 = vmatprep.subr.bf16.mxu0 0
        %2168 = vmatpush1.bf16.msra.mxu0 %v2093
        %2169 = vmatprep.subr.bf16.mxu0 0
        %2170 = vmatpush1.bf16.msra.mxu0 %v2094
        %2171 = vmatprep.subr.bf16.mxu0 0
        %2172 = vmatpush1.bf16.msra.mxu0 %v2095
        %2173 = vmatprep.subr.bf16.mxu0 0
        %2174 = vmatpush1.bf16.msra.mxu0 %v2096
        %2175 = vmatprep.subr.bf16.mxu0 0
        %2176 = vmatpush1.bf16.msra.mxu0 %v2097
        %2177 = vmatprep.subr.bf16.mxu0 0
        %2178 = vmatpush1.bf16.msra.mxu0 %v2098
        %2179 = vmatprep.mubr.bf16.mxu0 %v1881
        %2180 = vmatmul.mubr.bf16.gmra.mrb[0].mxu0 %v1880
        %v2181 = vpop.f32.mrb[0].mxu0
        %v2182 = vadd.f32 %v1953, %v2181
        %v2183 = vpop.f32.mrb[0].mxu0
        %v2184 = vpop.f32.mrb[0].mxu0
        %v2185 = vadd.f32 %v1953, %v2184
        %v2186 = vpop.f32.mrb[0].mxu0
        %2187 = vdwg.mxu0
        %2188 = vmatprep.subr.bf16.mxu0 0
        %2189 = vmatpush1.bf16.msra.mxu0 %v2099
        %2190 = vmatprep.subr.bf16.mxu0 0
        %2191 = vmatpush1.bf16.msra.mxu0 %v2100
        %2192 = vmatprep.subr.bf16.mxu0 0
        %2193 = vmatpush1.bf16.msra.mxu0 %v2101
        %2194 = vmatprep.subr.bf16.mxu0 0
        %2195 = vmatpush1.bf16.msra.mxu0 %v2102
        %2196 = vmatprep.subr.bf16.mxu0 0
        %2197 = vmatpush1.bf16.msra.mxu0 %v2103
        %2198 = vmatprep.subr.bf16.mxu0 0
        %2199 = vmatpush1.bf16.msra.mxu0 %v2104
        %2200 = vmatprep.subr.bf16.mxu0 0
        %2201 = vmatpush1.bf16.msra.mxu0 %v2105
        %2202 = vmatprep.subr.bf16.mxu0 0
        %2203 = vmatpush1.bf16.msra.mxu0 %v2106
        %2204 = vmatprep.subr.bf16.mxu0 0
        %2205 = vmatpush1.bf16.msra.mxu0 %v2107
        %2206 = vmatprep.subr.bf16.mxu0 0
        %2207 = vmatpush1.bf16.msra.mxu0 %v2108
        %2208 = vmatprep.subr.bf16.mxu0 0
        %2209 = vmatpush1.bf16.msra.mxu0 %v2109
        %2210 = vmatprep.subr.bf16.mxu0 0
        %2211 = vmatpush1.bf16.msra.mxu0 %v2110
        %2212 = vmatprep.subr.bf16.mxu0 0
        %2213 = vmatpush1.bf16.msra.mxu0 %v2111
        %2214 = vmatprep.subr.bf16.mxu0 0
        %2215 = vmatpush1.bf16.msra.mxu0 %v2112
        %2216 = vmatprep.subr.bf16.mxu0 0
        %2217 = vmatpush1.bf16.msra.mxu0 %v2113
        %2218 = vmatprep.subr.bf16.mxu0 0
        %2219 = vmatpush1.bf16.msra.mxu0 %v2114
        %2220 = vmatprep.mubr.bf16.mxu0 %v1883
        %2221 = vmatmul.mubr.bf16.gmra.mrb[0].mxu0 %v1882
        %v2222 = vpop.f32.mrb[0].mxu0
        %v2223 = vadd.f32 %v2182, %v2222
        %v2224 = vpop.f32.mrb[0].mxu0
        %v2225 = vpop.f32.mrb[0].mxu0
        %v2226 = vadd.f32 %v2185, %v2225
        %v2227 = vpop.f32.mrb[0].mxu0
        %2228 = vdwg.mxu0
        %v2229 = vadd.f32 %v1497, %v2223
        %v2230 = vadd.f32 %v1498, %v2226
        %2231 = vst [vmem:[%s541] sm:$0xff] %v2229
        %2232 = vst [vmem:[%s541 + $0x8] sm:$0xff] %v2230
        %s2233 = sand.u32 %s319, 1
        %s2234 = scalar_lea.sflag [#allocation4], %s2233
        %s2235 = sand.u32 %s319, 1
        %s2236 = smul.addr %s2235, 16
        %s2237 = scalar_lea.vmem [#allocation14], %s2236
        // Predicated region
        $region101: #{tpu_custom_call.1} parent=71 // pred_check
          %p2238 = pneg %p329
        $region102: #{tpu_custom_call.1} parent=71 // pred_check_branch
          %2240 = sbr.rel (%p2238) target = $region104
        $region103: #{tpu_custom_call.1} parent=71 // pred_region
          %s2242 = ssub.s32 256, 256
          %2243 = vsyncadd %s2234, %s2242
          %s2244 = smul.addr %s33, 2
          %s2245 = smul.addr %s2244, 128
          %s2246 = scalar_lea.hbm %s13, %s2245
          %s2247 = sshll.u32 %s2237, 4
          %s2248 = int_to_ptr.vmem [resolvable:$true] %s2247
          %2253 = dma.vmem_to_hbm [thread:$0]  %s2248, 256, %s2246, %s2234, 128, 128, 8
        $region104: #{tpu_custom_call.1} parent=71 // pred_fallthru
          _
      $region72: #{tpu_custom_call.1} parent=5 // pred_fallthru
        _
      %p2254 = scmp.le.s32.totalorder 2, %s28
      // Predicated region
      $region105: #{tpu_custom_call.1} parent=5 // pred_check
        %p2255 = pneg %p2254
      $region106: #{tpu_custom_call.1} parent=5 // pred_check_branch
        %2257 = sbr.rel (%p2255) target = $region108
      $region107: #{tpu_custom_call.1} parent=5 // pred_region
        %s2258 = ssub.s32 %s28, 2
        // Predicated region
        $region109: #{tpu_custom_call.1} parent=107 // pred_check
          %p2259 = pneg %p335
        $region110: #{tpu_custom_call.1} parent=107 // pred_check_branch
          %2261 = sbr.rel (%p2259) target = $region112
        $region111: #{tpu_custom_call.1} parent=107 // pred_region
          %s2262 = sand.u32 %s320, 1
          %s2263 = scalar_lea.sflag [#allocation4], %s2262
          %s2264 = sand.u32 %s320, 1
          %s2265 = smul.addr %s2264, 16
          %s2266 = scalar_lea.vmem [#allocation14], %s2265
          %2267 = dma.done %s2263, 256
        $region112: #{tpu_custom_call.1} parent=107 // pred_fallthru
          _
      $region108: #{tpu_custom_call.1} parent=5 // pred_fallthru
        _
    $region6: #{tpu_custom_call.1} parent=1 // loop_footer
      %s32 = sadd.s32 1, %s28
    $region7: #{tpu_custom_call.1} parent=1 // loop_footer_branch
      %27 = sbr.rel target = $region3
    $region8: #{tpu_custom_call.1} parent=1 // loop_exit
      _
    %2268 = vsyncpa [#allocation3], 1
    %s2269 = scalar_lea.sflag [#allocation3], 1
    %2270 = vsyncpa %s2269, 1
    %2271 = vsyncpa [#allocation6], 1
    %2272 = vsyncpa [#allocation9], 1
    %2273 = vsyncpa [#allocation12], 1
    %2274 = vsyncpa [#allocation4], 1
    %s2275 = scalar_lea.sflag [#allocation4], 1
    %2276 = vsyncpa %s2275, 1

</llo_original>
